<compile_context>
chip_gen: v7x
topology: tpu7x:2x2x1
jax: 0.10.0
libtpu: 0.0.40
codegen_flags: <defaults>
</compile_context>

<pallas_src>
import functools

import numpy as np
import jax
import jax.numpy as jnp
from jax.experimental import pallas as pl
from jax.experimental.pallas import tpu as pltpu


# ----------------------------------------------------------------------------
# Deterministic parameter construction (equivalent to librosa.filters.mel with
# htk=False, norm='slaney', i.e. what the PyTorch module registers as buffers).
# ----------------------------------------------------------------------------
def _hz_to_mel(freq):
    freq = np.asarray(freq, dtype=np.float64)
    f_sp = 200.0 / 3
    mels = freq / f_sp
    min_log_hz = 1000.0
    min_log_mel = min_log_hz / f_sp
    logstep = np.log(6.4) / 27.0
    log_t = freq >= min_log_hz
    mels = np.where(
        log_t, min_log_mel + np.log(np.maximum(freq, 1e-12) / min_log_hz) / logstep, mels)
    return mels


def _mel_to_hz(mels):
    mels = np.asarray(mels, dtype=np.float64)
    f_sp = 200.0 / 3
    freqs = f_sp * mels
    min_log_hz = 1000.0
    min_log_mel = min_log_hz / f_sp
    logstep = np.log(6.4) / 27.0
    log_t = mels >= min_log_mel
    freqs = np.where(log_t, min_log_hz * np.exp(logstep * (mels - min_log_mel)), freqs)
    return freqs


def mel_filterbank(sr, n_fft, n_mels, fmin, fmax):
    """Slaney-style mel filterbank, shape (n_mels, n_fft//2+1)."""
    n_freq = n_fft // 2 + 1
    fftfreqs = np.linspace(0.0, sr / 2.0, n_freq)
    mels = np.linspace(_hz_to_mel(fmin), _hz_to_mel(fmax), n_mels + 2)
    mel_f = _mel_to_hz(mels)
    fdiff = np.diff(mel_f)
    ramps = mel_f[:, None] - fftfreqs[None, :]
    weights = np.zeros((n_mels, n_freq), dtype=np.float64)
    for i in range(n_mels):
        lower = -ramps[i] / fdiff[i]
        upper = ramps[i + 2] / fdiff[i + 1]
        weights[i] = np.maximum(0.0, np.minimum(lower, upper))
    enorm = 2.0 / (mel_f[2:n_mels + 2] - mel_f[:n_mels])
    weights *= enorm[:, None]
    return weights.astype(np.float32)


def _hann_window_padded(win_length, fft_size):
    """torch.hann_window(win_length) (periodic), center-padded to fft_size
    exactly as torch.stft does when win_length < n_fft."""
    n = np.arange(win_length)
    w = 0.5 - 0.5 * np.cos(2.0 * np.pi * n / win_length)
    full = np.zeros(fft_size, dtype=np.float64)
    left = (fft_size - win_length) // 2
    full[left:left + win_length] = w
    return full


def _round_up(x, m):
    return ((x + m - 1) // m) * m


def _choose_tile_m(m):
    # 256 fully fills the v6e/v7x 256x256 MXU (2x the v5e 128x128 one) and keeps
    # the f32 working set under v5e's 16 MiB default scoped VMEM.  Smaller
    # candidates only trigger for tiny inputs, chosen so the grid length stays
    # >= 2 (keeps the second v7x TensorCore busy via the "parallel" axis).
    for cand in (256, 128, 64, 32, 16, 8):
        if m > cand:
            return cand
    return 8


# ----------------------------------------------------------------------------
# Pallas kernel: (tm, fft) frames -> (tm, n_mels_pad) log10-mel
# ----------------------------------------------------------------------------
def _mel_kernel(frames_ref, wdft_ref, mel_ref, out_ref, *, n_freq_k, eps):
    frames = frames_ref[...]
    # Fused windowed DFT: one MXU matmul; columns [0:Fk) = cos, [Fk:2Fk) = -sin.
    reim = jnp.dot(frames, wdft_ref[...], preferred_element_type=jnp.float32)
    re = reim[:, :n_freq_k]            # 128-aligned lane split, no relayout
    im = reim[:, n_freq_k:]
    power = re * re + im * im
    amp = jnp.sqrt(jnp.maximum(power, eps))
    mel = jnp.dot(amp, mel_ref[...], preferred_element_type=jnp.float32)
    mel = jnp.maximum(mel, eps)
    out_ref[...] = jnp.log(mel) * np.float32(1.0 / np.log(10.0))  # log10


def mel_spectrogram(x, *, fs=22050, fft_size=1024, hop_size=256, win_length=None,
                    num_mels=80, fmin=80, fmax=7600, eps=1e-10):
    """Returns (B, num_mels, n_frames) log10 mel-spectrogram (center=True)."""
    if x.ndim == 3:
        x = x.reshape(-1, x.shape[2])
    x = x.astype(jnp.float32)
    B, T = x.shape
    win_length = fft_size if win_length is None else win_length
    n_freq = fft_size // 2 + 1

    window = _hann_window_padded(win_length, fft_size)          # (fft,)
    mel_w = mel_filterbank(fs, fft_size, num_mels, fmin, fmax)  # (n_mels, n_freq)

    # --- exact frequency truncation: keep up to the last non-zero mel column ---
    nz = np.nonzero(np.any(mel_w != 0.0, axis=0))[0]
    n_keep = int(nz[-1]) + 1 if nz.size else n_freq
    if not np.all(mel_w[:, n_keep:] == 0.0):   # safety guard (true by construction)
        n_keep = n_freq
    lane = 128
    Fk = _round_up(n_keep, lane)               # truncated + lane-padded freq bins
    n_mels_pad = _round_up(num_mels, lane)

    # Fused windowed DFT basis [cos | -sin], shape (fft, 2*Fk).
    n = np.arange(fft_size)
    f = np.arange(n_keep)
    ang = 2.0 * np.pi * np.outer(n, f) / fft_size
    wdft = np.zeros((fft_size, 2 * Fk), np.float32)
    wdft[:, :n_keep] = window[:, None] * np.cos(ang)
    wdft[:, Fk:Fk + n_keep] = window[:, None] * -np.sin(ang)

    mel_p = np.zeros((Fk, n_mels_pad), np.float32)
    mel_p[:n_keep, :num_mels] = mel_w.T[:n_keep]

    # --- torch.stft(center=True) style reflect padding + framing (glue) ---
    pad = fft_size // 2
    x_pad = jnp.pad(x, ((0, 0), (pad, pad)), mode="reflect")
    n_frames = 1 + T // hop_size
    M = B * n_frames
    tm = _choose_tile_m(M)
    M_pad = _round_up(M, tm)
    g = np.arange(M_pad)
    b_idx = np.minimum(g // n_frames, B - 1).astype(np.int32)
    f_idx = np.where(g < M, g % n_frames, 0).astype(np.int32)
    col = (f_idx[:, None] * hop_size + np.arange(fft_size)[None, :]).astype(np.int32)
    frames = x_pad[b_idx[:, None], col]        # (M_pad, fft); padded rows discarded
    # TODO(synk): build frames inside the kernel straight from the padded signal
    # (memory_space=pl.ANY + per-block DMA) to drop this 4x-overlapped gather;
    # not done here because the f32 kernel is MXU-bound (gather is hidden-ish)
    # and the shifted-row assembly needs misaligned sublane slices / manual
    # double buffering — revisit together with a bf16 DFT path.

    grid = (M_pad // tm,)
    cost = pl.CostEstimate(
        flops=int(2 * M_pad * fft_size * (2 * Fk) + 2 * M_pad * Fk * n_mels_pad),
        transcendentals=int(M_pad * (Fk + n_mels_pad)),
        bytes_accessed=int(4 * (M_pad * fft_size + fft_size * 2 * Fk
                                + Fk * n_mels_pad + M_pad * n_mels_pad)),
    )
    kernel = functools.partial(_mel_kernel, n_freq_k=Fk, eps=np.float32(eps))
    out = pl.pallas_call(
        kernel,
        out_shape=jax.ShapeDtypeStruct((M_pad, n_mels_pad), jnp.float32),
        grid_spec=pltpu.PrefetchScalarGridSpec(
            num_scalar_prefetch=0,
            grid=grid,
            in_specs=[
                pl.BlockSpec((tm, fft_size), lambda i: (i, 0)),
                # Weights: constant index_map -> DMAed once, reused every step.
                pl.BlockSpec((fft_size, 2 * Fk), lambda i: (0, 0)),
                pl.BlockSpec((Fk, n_mels_pad), lambda i: (0, 0)),
            ],
            out_specs=pl.BlockSpec((tm, n_mels_pad), lambda i: (i, 0)),
        ),
        compiler_params=pltpu.CompilerParams(
            dimension_semantics=("parallel",),   # shard frame tiles across v7x's 2 TCs
        ),
        cost_estimate=cost,
    )(frames, jnp.asarray(wdft), jnp.asarray(mel_p))

    mel = out[:M, :num_mels].reshape(B, n_frames, num_mels)
    return jnp.transpose(mel, (0, 2, 1))  # (B, #mels, #frames)


def _reference(x, *, fs, fft_size, hop_size, win_length, num_mels, fmin, fmax, eps):
    """Pure-JAX reference (FFT-based) replicating the PyTorch forward."""
    if x.ndim == 3:
        x = x.reshape(-1, x.shape[2])
    B, T = x.shape
    win_length = fft_size if win_length is None else win_length
    pad = fft_size // 2
    x_pad = jnp.pad(x.astype(jnp.float32), ((0, 0), (pad, pad)), mode="reflect")
    n_frames = 1 + T // hop_size
    idx = (np.arange(n_frames)[:, None] * hop_size
           + np.arange(fft_size)[None, :]).astype(np.int32)
    frames = x_pad[:, idx]  # (B, n_frames, fft)
    window = jnp.asarray(_hann_window_padded(win_length, fft_size), dtype=jnp.float32)
    spec = jnp.fft.rfft(frames * window, axis=-1)
    power = jnp.real(spec) ** 2 + jnp.imag(spec) ** 2
    amp = jnp.sqrt(jnp.clip(power, min=eps))
    melmat_t = jnp.asarray(mel_filterbank(fs, fft_size, num_mels, fmin, fmax).T)
    x_mel = jnp.clip(amp @ melmat_t, min=eps)
    return jnp.transpose(jnp.log10(x_mel), (0, 2, 1))


if __name__ == "__main__":
    key = jax.random.PRNGKey(0)
    # Module defaults: fs=22050, fft_size=1024, hop_size=256, num_mels=80.
    B, T = 2, 4096                     # -> 17 frames per batch item (small)
    x = jax.random.normal(key, (B, T), dtype=jnp.float32)

    out = mel_spectrogram(x, fs=22050, fft_size=1024, hop_size=256,
                          win_length=None, num_mels=80, fmin=80, fmax=7600,
                          eps=1e-10)
    out = jax.block_until_ready(out)
    assert out.shape == (B, 80, 1 + T // 256), out.shape

    ref = _reference(x, fs=22050, fft_size=1024, hop_size=256, win_length=None,
                     num_mels=80, fmin=80, fmax=7600, eps=1e-10)
    np.testing.assert_allclose(np.asarray(out), np.asarray(ref), rtol=2e-3, atol=2e-3)

    print("KERNEL_OK")
</pallas_src>

<mosaic_0001>
module attributes {stable_mosaic.version = 11 : i64} {
  func.func @_mel_kernel(%arg0: i32, %arg1: memref<32x1024xf32, #tpu.memory_space<vmem>>, %arg2: memref<1024x768xf32, #tpu.memory_space<vmem>>, %arg3: memref<384x128xf32, #tpu.memory_space<vmem>>, %arg4: memref<32x128xf32, #tpu.memory_space<vmem>>) attributes {dimension_semantics = [#tpu.dimension_semantics<parallel>], iteration_bounds = array<i64: 2>, scalar_prefetch = 0 : i64, scratch_operands = 0 : i64, tpu.core_type = #tpu.core_type<tc>, window_params = [{transform_indices = @transform_0, window_bounds = array<i64: 32, 1024>}, {pipeline_mode = #tpu.pipeline_mode<synchronous>, transform_indices = @transform_1, window_bounds = array<i64: 1024, 768>}, {pipeline_mode = #tpu.pipeline_mode<synchronous>, transform_indices = @transform_2, window_bounds = array<i64: 384, 128>}, {transform_indices = @transform_3, window_bounds = array<i64: 32, 128>}]} {
    %c0 = arith.constant 0 : index
    %c0_0 = arith.constant 0 : index
    %0 = vector.load %arg1[%c0, %c0_0] : memref<32x1024xf32, #tpu.memory_space<vmem>>, vector<32x1024xf32>
    %c0_1 = arith.constant 0 : index
    %c0_2 = arith.constant 0 : index
    %1 = vector.load %arg2[%c0_1, %c0_2] : memref<1024x768xf32, #tpu.memory_space<vmem>>, vector<1024x768xf32>
    %cst = arith.constant dense<0.000000e+00> : vector<32x768xf32>
    %2 = tpu.matmul %0, %1, %cst {dimension_numbers = #tpu.dot_dimension_numbers<[1], [0], [0], [1], [0, 0, 1, 1], [], []>} : vector<32x1024xf32>, vector<1024x768xf32>, vector<32x768xf32> -> vector<32x768xf32>
    %3 = vector.extract_strided_slice %2 {offsets = [0, 0], sizes = [32, 384], strides = [1, 1]} : vector<32x768xf32> to vector<32x384xf32>
    %4 = vector.extract_strided_slice %2 {offsets = [0, 384], sizes = [32, 384], strides = [1, 1]} : vector<32x768xf32> to vector<32x384xf32>
    %5 = arith.mulf %3, %3 : vector<32x384xf32>
    %6 = arith.mulf %4, %4 : vector<32x384xf32>
    %7 = arith.addf %5, %6 : vector<32x384xf32>
    %cst_3 = arith.constant 1.000000e-10 : f32
    %8 = vector.broadcast %cst_3 : f32 to vector<32x384xf32>
    %9 = arith.maximumf %7, %8 : vector<32x384xf32>
    %10 = math.sqrt %9 : vector<32x384xf32>
    %c0_4 = arith.constant 0 : index
    %c0_5 = arith.constant 0 : index
    %11 = vector.load %arg3[%c0_4, %c0_5] : memref<384x128xf32, #tpu.memory_space<vmem>>, vector<384x128xf32>
    %cst_6 = arith.constant dense<0.000000e+00> : vector<32x128xf32>
    %12 = tpu.matmul %10, %11, %cst_6 {dimension_numbers = #tpu.dot_dimension_numbers<[1], [0], [0], [1], [0, 0, 1, 1], [], []>} : vector<32x384xf32>, vector<384x128xf32>, vector<32x128xf32> -> vector<32x128xf32>
    %cst_7 = arith.constant 1.000000e-10 : f32
    %13 = vector.broadcast %cst_7 : f32 to vector<32x128xf32>
    %14 = arith.maximumf %12, %13 : vector<32x128xf32>
    %15 = math.log %14 : vector<32x128xf32>
    %cst_8 = arith.constant 0.434294492 : f32
    %16 = vector.broadcast %cst_8 : f32 to vector<32x128xf32>
    %17 = arith.mulf %15, %16 : vector<32x128xf32>
    %c0_9 = arith.constant 0 : index
    %c0_10 = arith.constant 0 : index
    %18 = vector.load %arg4[%c0_9, %c0_10] : memref<32x128xf32, #tpu.memory_space<vmem>>, vector<32x128xf32>
    tpu.vector_store %arg4[%c0_9, %c0_10], %17 {strides = array<i32>} : memref<32x128xf32, #tpu.memory_space<vmem>>, vector<32x128xf32>,
    return
  }
  func.func @transform_0(%arg0: i32) -> (i32, i32) {
    %c0_i32 = arith.constant 0 : i32
    %c0_i32_0 = arith.constant 0 : i32
    return %arg0, %c0_i32 : i32, i32
  }
  func.func @transform_1(%arg0: i32) -> (i32, i32) {
    %c0_i32 = arith.constant 0 : i32
    %c0_i32_0 = arith.constant 0 : i32
    %c0_i32_1 = arith.constant 0 : i32
    return %c0_i32, %c0_i32_0 : i32, i32
  }
  func.func @transform_2(%arg0: i32) -> (i32, i32) {
    %c0_i32 = arith.constant 0 : i32
    %c0_i32_0 = arith.constant 0 : i32
    %c0_i32_1 = arith.constant 0 : i32
    return %c0_i32, %c0_i32_0 : i32, i32
  }
  func.func @transform_3(%arg0: i32) -> (i32, i32) {
    %c0_i32 = arith.constant 0 : i32
    %c0_i32_0 = arith.constant 0 : i32
    return %arg0, %c0_i32 : i32, i32
  }
}

</mosaic_0001>

<llo_original>
// kernel: tpu_custom_call.1
$region0: #{tpu_custom_call.1}
  #allocation0 [shape = 'u32[]', space=smem, size = 0x4, offset = 0x4, fixed_abs, tag = 'smem constant byte address 0x4 - core index']
  #allocation1 [shape = 'u32[144,128]{1,0:T(1,128)}', space=vmem, size = 0x12000, scoped, tag = 'internal scratch']
  %s0 = inlined_call_operand.hbm [shape: f32[64,1024], index: 0, kind: input, shape index: {}]
  %s1 = inlined_call_operand.hbm [shape: f32[1024,768], index: 1, kind: input, shape index: {}]
  %s2 = inlined_call_operand.hbm [shape: f32[384,128], index: 2, kind: input, shape index: {}]
  %s3 = inlined_call_operand.hbm [shape: f32[64,128], index: 3, kind: output, shape index: {}]
  %s4 = sld [smem:[#allocation0]]
  $region57: #{tpu_custom_call.1} parent=0
    _
  %s6 = ssub.s32 1, %s4
  %s7 = scalar_select 0, %s6, %s4
  $region1: #{tpu_custom_call.1} parent=0
    #allocation2 [shape = 'u8[262144]{0}', space=vmem, size = 0x40000, scoped, tag = 'input window, operand 0']
    #allocation3 [shape = 's32[2]{0}', space=sflag, size = 0x8, scoped, tag = 'scoped memory for tpu_custom_call.1']
    #allocation4 [shape = 's32[2]{0}', space=sflag, size = 0x8, scoped, tag = 'scoped memory for tpu_custom_call.1']
    #allocation5 [shape = 'u8[3145728]{0}', space=vmem, size = 0x300000, scoped, tag = 'input window, operand 1, single buffered']
    #allocation6 [shape = 's32[1]{0}', space=sflag, size = 0x4, scoped, tag = 'scoped memory for tpu_custom_call.1']
    #allocation7 [shape = 'u8[196608]{0}', space=vmem, size = 0x30000, scoped, tag = 'input window, operand 2, single buffered']
    #allocation8 [shape = 'u8[32768]{0}', space=vmem, size = 0x8000, scoped, tag = 'output window, operand 0']
    %8 = vsyncpa [#allocation3], 0
    %s9 = scalar_lea.sflag [#allocation3], 1
    %10 = vsyncpa %s9, 0
    %11 = vsyncpa [#allocation6], 0
    %12 = vsyncpa [#allocation4], 0
    %s13 = scalar_lea.sflag [#allocation4], 1
    %14 = vsyncpa %s13, 0
    loop: start=0, step=1, limit=4
    $region2: #{tpu_custom_call.1} parent=1 // loop_pre_header
      _
    $region3: #{tpu_custom_call.1} parent=1 // loop_header
      %s16 = sphi 0, %s20
      %p17 = scmp.ge.s32.totalorder %s16, 4
      %s26 = sphi 0, %s28
      %s29 = sphi 0, %s26
      %s30 = sphi 0, %s29
      %s46 = sphi 0, %s30
      %s50 = sphi 0, %s50
      %s52 = sphi 0, %s50
      %s53 = sphi 0, %s52
      %s67 = sphi 0, %s53
      %s71 = sphi 0, %s71
      %s73 = sphi 0, %s71
      %s74 = sphi 0, %s73
      %s88 = sphi 0, %s74
      %s94 = sphi 0, %s96
      %s97 = sphi 0, %s94
      %s98 = sphi 0, %s97
      %s114 = sphi 0, %s98
    $region4: #{tpu_custom_call.1} parent=1 // loop_header_branch
      %19 = sbr.rel (%p17) target = $region8
    $region5: #{tpu_custom_call.1} parent=1 // loop_body
      %s21 = ssub.s32 %s16, 1
      %s22 = ssub.s32 %s16, 2
      %s23 = sadd.s32 %s16, 1
      %s24 = ssub.s32 %s16, %s23
      %p25 = scmp.eq.s32.totalorder %s24, 0
      %s27 = sadd.s32 %s26, 1
      %s28 = scalar_select %p25, %s26, %s27
      %p31 = pneg %p25
      %p32 = scmp.eq.s32.totalorder %s16, 1
      %p33 = por %p31, %p32
      %p34 = scmp.ne.s32.totalorder %s26, %s29
      %p35 = scmp.eq.s32.totalorder %s16, 0
      %p36 = por %p34, %p35
      %p37 = scmp.ne.s32.totalorder %s26, %s29
      %p38 = scmp.eq.s32.totalorder %s21, 1
      %p39 = por %p37, %p38
      %p40 = scmp.ne.s32.totalorder %s29, %s30
      %p41 = scmp.eq.s32.totalorder %s21, 0
      %p42 = por %p40, %p41
      %p43 = scmp.ne.s32.totalorder %s29, %s30
      %p44 = scmp.eq.s32.totalorder %s22, 1
      %p45 = por %p43, %p44
      %p47 = scmp.ne.s32.totalorder %s30, %s46
      %p48 = scmp.eq.s32.totalorder %s22, 0
      %p49 = por %p47, %p48
      %s51 = sadd.s32 %s50, 1
      %p54 = scmp.eq.s32.totalorder %s16, 1
      %p55 = scmp.ne.s32.totalorder %s50, %s52
      %p56 = scmp.eq.s32.totalorder %s16, 0
      %p57 = por %p55, %p56
      %p58 = scmp.ne.s32.totalorder %s50, %s52
      %p59 = scmp.eq.s32.totalorder %s21, 1
      %p60 = por %p58, %p59
      %p61 = scmp.ne.s32.totalorder %s52, %s53
      %p62 = scmp.eq.s32.totalorder %s21, 0
      %p63 = por %p61, %p62
      %p64 = scmp.ne.s32.totalorder %s52, %s53
      %p65 = scmp.eq.s32.totalorder %s22, 1
      %p66 = por %p64, %p65
      %p68 = scmp.ne.s32.totalorder %s53, %s67
      %p69 = scmp.eq.s32.totalorder %s22, 0
      %p70 = por %p68, %p69
      %s72 = sadd.s32 %s71, 1
      %p75 = scmp.eq.s32.totalorder %s16, 1
      %p76 = scmp.ne.s32.totalorder %s71, %s73
      %p77 = scmp.eq.s32.totalorder %s16, 0
      %p78 = por %p76, %p77
      %p79 = scmp.ne.s32.totalorder %s71, %s73
      %p80 = scmp.eq.s32.totalorder %s21, 1
      %p81 = por %p79, %p80
      %p82 = scmp.ne.s32.totalorder %s73, %s74
      %p83 = scmp.eq.s32.totalorder %s21, 0
      %p84 = por %p82, %p83
      %p85 = scmp.ne.s32.totalorder %s73, %s74
      %p86 = scmp.eq.s32.totalorder %s22, 1
      %p87 = por %p85, %p86
      %p89 = scmp.ne.s32.totalorder %s74, %s88
      %p90 = scmp.eq.s32.totalorder %s22, 0
      %p91 = por %p89, %p90
      %s92 = ssub.s32 %s16, %s23
      %p93 = scmp.eq.s32.totalorder %s92, 0
      %s95 = sadd.s32 %s94, 1
      %s96 = scalar_select %p93, %s94, %s95
      %p99 = pneg %p93
      %p100 = scmp.eq.s32.totalorder %s16, 1
      %p101 = por %p99, %p100
      %p102 = scmp.ne.s32.totalorder %s94, %s97
      %p103 = scmp.eq.s32.totalorder %s16, 0
      %p104 = por %p102, %p103
      %p105 = scmp.ne.s32.totalorder %s94, %s97
      %p106 = scmp.eq.s32.totalorder %s21, 1
      %p107 = por %p105, %p106
      %p108 = scmp.ne.s32.totalorder %s97, %s98
      %p109 = scmp.eq.s32.totalorder %s21, 0
      %p110 = por %p108, %p109
      %p111 = scmp.ne.s32.totalorder %s97, %s98
      %p112 = scmp.eq.s32.totalorder %s22, 1
      %p113 = por %p111, %p112
      %p115 = scmp.ne.s32.totalorder %s98, %s114
      %p116 = scmp.eq.s32.totalorder %s22, 0
      %p117 = por %p115, %p116
      %p118 = scmp.le.s32.totalorder 1, %s16
      %p119 = scmp.lt.s32.totalorder %s16, 3
      %p120 = pnand %p118, %p119
      %p121 = pneg %p120
      // Predicated region
      $region9: #{tpu_custom_call.1} parent=5 // pred_check
        _
      $region10: #{tpu_custom_call.1} parent=5 // pred_check_branch
        %123 = sbr.rel (%p120) target = $region12
      $region11: #{tpu_custom_call.1} parent=5 // pred_region
        %s124 = ssub.s32 %s16, 1
        // Predicated region
        $region13: #{tpu_custom_call.1} parent=11 // pred_check
          %p125 = pneg %p63
        $region14: #{tpu_custom_call.1} parent=11 // pred_check_branch
          %127 = sbr.rel (%p125) target = $region16
        $region15: #{tpu_custom_call.1} parent=11 // pred_region
          %s129 = ssub.s32 98304, 98304
          %130 = vsyncadd [#allocation6], %s129
          %s131 = sshll.u32 [#allocation5], 4
          %s132 = int_to_ptr.vmem [resolvable:$true] %s131
          %137 = dma.hbm_to_vmem [thread:$0]  %s1, 98304, %s132, [#allocation6], 768, 768, 48
        $region16: #{tpu_custom_call.1} parent=11 // pred_fallthru
          _
        // Predicated region
        $region17: #{tpu_custom_call.1} parent=11 // pred_check
          %p138 = pneg %p84
        $region18: #{tpu_custom_call.1} parent=11 // pred_check_branch
          %140 = sbr.rel (%p138) target = $region20
        $region19: #{tpu_custom_call.1} parent=11 // pred_region
          %s142 = ssub.s32 6144, 6144
          %143 = vsyncadd [#allocation6], %s142
          %s144 = sshll.u32 [#allocation7], 4
          %s145 = int_to_ptr.vmem [resolvable:$true] %s144
          %150 = dma.hbm_to_vmem [thread:$0]  %s2, 6144, %s145, [#allocation6], 128, 128, 8
        $region20: #{tpu_custom_call.1} parent=11 // pred_fallthru
          _
      $region12: #{tpu_custom_call.1} parent=5 // pred_fallthru
        _
      %p151 = scmp.lt.s32.totalorder %s16, 2
      // Predicated region
      $region21: #{tpu_custom_call.1} parent=5 // pred_check
        %p152 = pneg %p151
      $region22: #{tpu_custom_call.1} parent=5 // pred_check_branch
        %154 = sbr.rel (%p152) target = $region24
      $region23: #{tpu_custom_call.1} parent=5 // pred_region
        // Predicated region
        $region25: #{tpu_custom_call.1} parent=23 // pred_check
          %p155 = pneg %p36
        $region26: #{tpu_custom_call.1} parent=23 // pred_check_branch
          %157 = sbr.rel (%p155) target = $region28
        $region27: #{tpu_custom_call.1} parent=23 // pred_region
          %s158 = sand.u32 %s26, 1
          %s159 = scalar_lea.sflag [#allocation3], %s158
          %s160 = sand.u32 %s26, 1
          %s161 = smul.addr %s160, 256
          %s162 = scalar_lea.vmem [#allocation2], %s161
          %s163 = smul.u32 4, %s16
          %s165 = ssub.s32 4096, 4096
          %166 = vsyncadd %s159, %s165
          %s167 = smul.addr %s163, 8
          %s168 = smul.addr %s167, 128
          %s169 = scalar_lea.hbm %s0, %s168
          %s170 = sshll.u32 %s162, 4
          %s171 = int_to_ptr.vmem [resolvable:$true] %s170
          %176 = dma.hbm_to_vmem [thread:$0]  %s169, 4096, %s171, %s159, 1024, 1024, 64
        $region28: #{tpu_custom_call.1} parent=23 // pred_fallthru
          _
      $region24: #{tpu_custom_call.1} parent=5 // pred_fallthru
        _
      %p177 = scmp.le.s32.totalorder 1, %s16
      %p178 = scmp.lt.s32.totalorder %s16, 3
      %p179 = pnand %p177, %p178
      %p180 = pneg %p179
      // Predicated region
      $region29: #{tpu_custom_call.1} parent=5 // pred_check
        _
      $region30: #{tpu_custom_call.1} parent=5 // pred_check_branch
        %182 = sbr.rel (%p179) target = $region32
      $region31: #{tpu_custom_call.1} parent=5 // pred_region
        %s183 = ssub.s32 %s16, 1
        %s184 = sand.u32 %s29, 1
        %s185 = scalar_lea.sflag [#allocation3], %s184
        %s186 = sand.u32 %s29, 1
        %s187 = smul.addr %s186, 256
        %s188 = scalar_lea.vmem [#allocation2], %s187
        // Predicated region
        $region33: #{tpu_custom_call.1} parent=31 // pred_check
          %p189 = pneg %p42
        $region34: #{tpu_custom_call.1} parent=31 // pred_check_branch
          %191 = sbr.rel (%p189) target = $region36
        $region35: #{tpu_custom_call.1} parent=31 // pred_region
          %192 = dma.done %s185, 4096
        $region36: #{tpu_custom_call.1} parent=31 // pred_fallthru
          _
        // Predicated region
        $region37: #{tpu_custom_call.1} parent=31 // pred_check
          %p193 = pneg %p63
        $region38: #{tpu_custom_call.1} parent=31 // pred_check_branch
          %195 = sbr.rel (%p193) target = $region40
        $region39: #{tpu_custom_call.1} parent=31 // pred_region
          %196 = dma.done [#allocation6], 98304
        $region40: #{tpu_custom_call.1} parent=31 // pred_fallthru
          _
        // Predicated region
        $region41: #{tpu_custom_call.1} parent=31 // pred_check
          %p197 = pneg %p84
        $region42: #{tpu_custom_call.1} parent=31 // pred_check_branch
          %199 = sbr.rel (%p197) target = $region44
        $region43: #{tpu_custom_call.1} parent=31 // pred_region
          %200 = dma.done [#allocation6], 6144
        $region44: #{tpu_custom_call.1} parent=31 // pred_fallthru
          _
        %s201 = sand.u32 %s29, 1
        %s202 = scalar_lea.sflag [#allocation3], %s201
        %s203 = sand.u32 %s29, 1
        %s204 = smul.addr %s203, 256
        %s205 = scalar_lea.vmem [#allocation2], %s204
        %p206 = pneg %p42
        %p207 = pneg %p39
        %p208 = pneg %p63
        %p209 = pneg %p60
        %p210 = pneg %p84
        %p211 = pneg %p81
        %p212 = pneg %p110
        %p213 = pneg %p107
        %s214 = sand.u32 %s97, 1
        %s215 = scalar_lea.sflag [#allocation4], %s214
        %s216 = sand.u32 %s97, 1
        %s217 = smul.addr %s216, 32
        %s218 = scalar_lea.vmem [#allocation8], %s217
        %s219 = smul.u32 4, %s21
        %s220 = smul.u32 4, %s21
        %v221 = vld [vmem:[%s188] sm:$0xff]
        %v222 = vld [vmem:[%s188 + $0x8] sm:$0xff]
        %v223 = vld [vmem:[%s188 + $0x10] sm:$0xff]
        %v224 = vld [vmem:[%s188 + $0x18] sm:$0xff]
        %v225 = vld [vmem:[%s188 + $0x20] sm:$0xff]
        %v226 = vld [vmem:[%s188 + $0x28] sm:$0xff]
        %v227 = vld [vmem:[%s188 + $0x30] sm:$0xff]
        %v228 = vld [vmem:[%s188 + $0x38] sm:$0xff]
        %v229 = vld [vmem:[%s188 + $0x40] sm:$0xff]
        %v230 = vld [vmem:[%s188 + $0x48] sm:$0xff]
        %v231 = vld [vmem:[%s188 + $0x50] sm:$0xff]
        %v232 = vld [vmem:[%s188 + $0x58] sm:$0xff]
        %v233 = vld [vmem:[%s188 + $0x60] sm:$0xff]
        %v234 = vld [vmem:[%s188 + $0x68] sm:$0xff]
        %v235 = vld [vmem:[%s188 + $0x70] sm:$0xff]
        %v236 = vld [vmem:[%s188 + $0x78] sm:$0xff]
        %v237 = vld [vmem:[%s188 + $0x80] sm:$0xff]
        %v238 = vld [vmem:[%s188 + $0x88] sm:$0xff]
        %v239 = vld [vmem:[%s188 + $0x90] sm:$0xff]
        %v240 = vld [vmem:[%s188 + $0x98] sm:$0xff]
        %v241 = vld [vmem:[%s188 + $0xa0] sm:$0xff]
        %v242 = vld [vmem:[%s188 + $0xa8] sm:$0xff]
        %v243 = vld [vmem:[%s188 + $0xb0] sm:$0xff]
        %v244 = vld [vmem:[%s188 + $0xb8] sm:$0xff]
        %v245 = vld [vmem:[%s188 + $0xc0] sm:$0xff]
        %v246 = vld [vmem:[%s188 + $0xc8] sm:$0xff]
        %v247 = vld [vmem:[%s188 + $0xd0] sm:$0xff]
        %v248 = vld [vmem:[%s188 + $0xd8] sm:$0xff]
        %v249 = vld [vmem:[%s188 + $0xe0] sm:$0xff]
        %v250 = vld [vmem:[%s188 + $0xe8] sm:$0xff]
        %v251 = vld [vmem:[%s188 + $0xf0] sm:$0xff]
        %v252 = vld [vmem:[%s188 + $0xf8] sm:$0xff]
        %v253 = vld [vmem:[#allocation5] sm:$0xff]
        %v254 = vld [vmem:[#allocation5 + $0x8] sm:$0xff]
        %v255 = vld [vmem:[#allocation5 + $0x10] sm:$0xff]
        %v256 = vld [vmem:[#allocation5 + $0x18] sm:$0xff]
        %v257 = vld [vmem:[#allocation5 + $0x20] sm:$0xff]
        %v258 = vld [vmem:[#allocation5 + $0x28] sm:$0xff]
        %v259 = vld [vmem:[#allocation5 + $0x30] sm:$0xff]
        %v260 = vld [vmem:[#allocation5 + $0x38] sm:$0xff]
        %v261 = vld [vmem:[#allocation5 + $0x40] sm:$0xff]
        %v262 = vld [vmem:[#allocation5 + $0x48] sm:$0xff]
        %v263 = vld [vmem:[#allocation5 + $0x50] sm:$0xff]
        %v264 = vld [vmem:[#allocation5 + $0x58] sm:$0xff]
        %v265 = vld [vmem:[#allocation5 + $0x60] sm:$0xff]
        %v266 = vld [vmem:[#allocation5 + $0x68] sm:$0xff]
        %v267 = vld [vmem:[#allocation5 + $0x70] sm:$0xff]
        %v268 = vld [vmem:[#allocation5 + $0x78] sm:$0xff]
        %v269 = vld [vmem:[#allocation5 + $0x80] sm:$0xff]
        %v270 = vld [vmem:[#allocation5 + $0x88] sm:$0xff]
        %v271 = vld [vmem:[#allocation5 + $0x90] sm:$0xff]
        %v272 = vld [vmem:[#allocation5 + $0x98] sm:$0xff]
        %v273 = vld [vmem:[#allocation5 + $0xa0] sm:$0xff]
        %v274 = vld [vmem:[#allocation5 + $0xa8] sm:$0xff]
        %v275 = vld [vmem:[#allocation5 + $0xb0] sm:$0xff]
        %v276 = vld [vmem:[#allocation5 + $0xb8] sm:$0xff]
        %v277 = vld [vmem:[#allocation5 + $0xc0] sm:$0xff]
        %v278 = vld [vmem:[#allocation5 + $0xc8] sm:$0xff]
        %v279 = vld [vmem:[#allocation5 + $0xd0] sm:$0xff]
        %v280 = vld [vmem:[#allocation5 + $0xd8] sm:$0xff]
        %v281 = vld [vmem:[#allocation5 + $0xe0] sm:$0xff]
        %v282 = vld [vmem:[#allocation5 + $0xe8] sm:$0xff]
        %v283 = vld [vmem:[#allocation5 + $0xf0] sm:$0xff]
        %v284 = vld [vmem:[#allocation5 + $0xf8] sm:$0xff]
        %v285 = vld [vmem:[#allocation5 + $0x100] sm:$0xff]
        %v286 = vld [vmem:[#allocation5 + $0x108] sm:$0xff]
        %v287 = vld [vmem:[#allocation5 + $0x110] sm:$0xff]
        %v288 = vld [vmem:[#allocation5 + $0x118] sm:$0xff]
        %v289 = vld [vmem:[#allocation5 + $0x120] sm:$0xff]
        %v290 = vld [vmem:[#allocation5 + $0x128] sm:$0xff]
        %v291 = vld [vmem:[#allocation5 + $0x130] sm:$0xff]
        %v292 = vld [vmem:[#allocation5 + $0x138] sm:$0xff]
        %v293 = vld [vmem:[#allocation5 + $0x140] sm:$0xff]
        %v294 = vld [vmem:[#allocation5 + $0x148] sm:$0xff]
        %v295 = vld [vmem:[#allocation5 + $0x150] sm:$0xff]
        %v296 = vld [vmem:[#allocation5 + $0x158] sm:$0xff]
        %v297 = vld [vmem:[#allocation5 + $0x160] sm:$0xff]
        %v298 = vld [vmem:[#allocation5 + $0x168] sm:$0xff]
        %v299 = vld [vmem:[#allocation5 + $0x170] sm:$0xff]
        %v300 = vld [vmem:[#allocation5 + $0x178] sm:$0xff]
        %v301 = vld [vmem:[#allocation5 + $0x180] sm:$0xff]
        %v302 = vld [vmem:[#allocation5 + $0x188] sm:$0xff]
        %v303 = vld [vmem:[#allocation5 + $0x190] sm:$0xff]
        %v304 = vld [vmem:[#allocation5 + $0x198] sm:$0xff]
        %v305 = vld [vmem:[#allocation5 + $0x1a0] sm:$0xff]
        %v306 = vld [vmem:[#allocation5 + $0x1a8] sm:$0xff]
        %v307 = vld [vmem:[#allocation5 + $0x1b0] sm:$0xff]
        %v308 = vld [vmem:[#allocation5 + $0x1b8] sm:$0xff]
        %v309 = vld [vmem:[#allocation5 + $0x1c0] sm:$0xff]
        %v310 = vld [vmem:[#allocation5 + $0x1c8] sm:$0xff]
        %v311 = vld [vmem:[#allocation5 + $0x1d0] sm:$0xff]
        %v312 = vld [vmem:[#allocation5 + $0x1d8] sm:$0xff]
        %v313 = vld [vmem:[#allocation5 + $0x1e0] sm:$0xff]
        %v314 = vld [vmem:[#allocation5 + $0x1e8] sm:$0xff]
        %v315 = vld [vmem:[#allocation5 + $0x1f0] sm:$0xff]
        %v316 = vld [vmem:[#allocation5 + $0x1f8] sm:$0xff]
        %v317 = vld [vmem:[#allocation5 + $0x200] sm:$0xff]
        %v318 = vld [vmem:[#allocation5 + $0x208] sm:$0xff]
        %v319 = vld [vmem:[#allocation5 + $0x210] sm:$0xff]
        %v320 = vld [vmem:[#allocation5 + $0x218] sm:$0xff]
        %v321 = vld [vmem:[#allocation5 + $0x220] sm:$0xff]
        %v322 = vld [vmem:[#allocation5 + $0x228] sm:$0xff]
        %v323 = vld [vmem:[#allocation5 + $0x230] sm:$0xff]
        %v324 = vld [vmem:[#allocation5 + $0x238] sm:$0xff]
        %v325 = vld [vmem:[#allocation5 + $0x240] sm:$0xff]
        %v326 = vld [vmem:[#allocation5 + $0x248] sm:$0xff]
        %v327 = vld [vmem:[#allocation5 + $0x250] sm:$0xff]
        %v328 = vld [vmem:[#allocation5 + $0x258] sm:$0xff]
        %v329 = vld [vmem:[#allocation5 + $0x260] sm:$0xff]
        %v330 = vld [vmem:[#allocation5 + $0x268] sm:$0xff]
        %v331 = vld [vmem:[#allocation5 + $0x270] sm:$0xff]
        %v332 = vld [vmem:[#allocation5 + $0x278] sm:$0xff]
        %v333 = vld [vmem:[#allocation5 + $0x280] sm:$0xff]
        %v334 = vld [vmem:[#allocation5 + $0x288] sm:$0xff]
        %v335 = vld [vmem:[#allocation5 + $0x290] sm:$0xff]
        %v336 = vld [vmem:[#allocation5 + $0x298] sm:$0xff]
        %v337 = vld [vmem:[#allocation5 + $0x2a0] sm:$0xff]
        %v338 = vld [vmem:[#allocation5 + $0x2a8] sm:$0xff]
        %v339 = vld [vmem:[#allocation5 + $0x2b0] sm:$0xff]
        %v340 = vld [vmem:[#allocation5 + $0x2b8] sm:$0xff]
        %v341 = vld [vmem:[#allocation5 + $0x2c0] sm:$0xff]
        %v342 = vld [vmem:[#allocation5 + $0x2c8] sm:$0xff]
        %v343 = vld [vmem:[#allocation5 + $0x2d0] sm:$0xff]
        %v344 = vld [vmem:[#allocation5 + $0x2d8] sm:$0xff]
        %v345 = vld [vmem:[#allocation5 + $0x2e0] sm:$0xff]
        %v346 = vld [vmem:[#allocation5 + $0x2e8] sm:$0xff]
        %v347 = vld [vmem:[#allocation5 + $0x2f0] sm:$0xff]
        %v348 = vld [vmem:[#allocation5 + $0x2f8] sm:$0xff]
        %v349 = vld [vmem:[#allocation5 + $0x300] sm:$0xff]
        %v350 = vld [vmem:[#allocation5 + $0x308] sm:$0xff]
        %v351 = vld [vmem:[#allocation5 + $0x310] sm:$0xff]
        %v352 = vld [vmem:[#allocation5 + $0x318] sm:$0xff]
        %v353 = vld [vmem:[#allocation5 + $0x320] sm:$0xff]
        %v354 = vld [vmem:[#allocation5 + $0x328] sm:$0xff]
        %v355 = vld [vmem:[#allocation5 + $0x330] sm:$0xff]
        %v356 = vld [vmem:[#allocation5 + $0x338] sm:$0xff]
        %v357 = vld [vmem:[#allocation5 + $0x340] sm:$0xff]
        %v358 = vld [vmem:[#allocation5 + $0x348] sm:$0xff]
        %v359 = vld [vmem:[#allocation5 + $0x350] sm:$0xff]
        %v360 = vld [vmem:[#allocation5 + $0x358] sm:$0xff]
        %v361 = vld [vmem:[#allocation5 + $0x360] sm:$0xff]
        %v362 = vld [vmem:[#allocation5 + $0x368] sm:$0xff]
        %v363 = vld [vmem:[#allocation5 + $0x370] sm:$0xff]
        %v364 = vld [vmem:[#allocation5 + $0x378] sm:$0xff]
        %v365 = vld [vmem:[#allocation5 + $0x380] sm:$0xff]
        %v366 = vld [vmem:[#allocation5 + $0x388] sm:$0xff]
        %v367 = vld [vmem:[#allocation5 + $0x390] sm:$0xff]
        %v368 = vld [vmem:[#allocation5 + $0x398] sm:$0xff]
        %v369 = vld [vmem:[#allocation5 + $0x3a0] sm:$0xff]
        %v370 = vld [vmem:[#allocation5 + $0x3a8] sm:$0xff]
        %v371 = vld [vmem:[#allocation5 + $0x3b0] sm:$0xff]
        %v372 = vld [vmem:[#allocation5 + $0x3b8] sm:$0xff]
        %v373 = vld [vmem:[#allocation5 + $0x3c0] sm:$0xff]
        %v374 = vld [vmem:[#allocation5 + $0x3c8] sm:$0xff]
        %v375 = vld [vmem:[#allocation5 + $0x3d0] sm:$0xff]
        %v376 = vld [vmem:[#allocation5 + $0x3d8] sm:$0xff]
        %v377 = vld [vmem:[#allocation5 + $0x3e0] sm:$0xff]
        %v378 = vld [vmem:[#allocation5 + $0x3e8] sm:$0xff]
        %v379 = vld [vmem:[#allocation5 + $0x3f0] sm:$0xff]
        %v380 = vld [vmem:[#allocation5 + $0x3f8] sm:$0xff]
        %v381 = vld [vmem:[#allocation5 + $0x400] sm:$0xff]
        %v382 = vld [vmem:[#allocation5 + $0x408] sm:$0xff]
        %v383 = vld [vmem:[#allocation5 + $0x410] sm:$0xff]
        %v384 = vld [vmem:[#allocation5 + $0x418] sm:$0xff]
        %v385 = vld [vmem:[#allocation5 + $0x420] sm:$0xff]
        %v386 = vld [vmem:[#allocation5 + $0x428] sm:$0xff]
        %v387 = vld [vmem:[#allocation5 + $0x430] sm:$0xff]
        %v388 = vld [vmem:[#allocation5 + $0x438] sm:$0xff]
        %v389 = vld [vmem:[#allocation5 + $0x440] sm:$0xff]
        %v390 = vld [vmem:[#allocation5 + $0x448] sm:$0xff]
        %v391 = vld [vmem:[#allocation5 + $0x450] sm:$0xff]
        %v392 = vld [vmem:[#allocation5 + $0x458] sm:$0xff]
        %v393 = vld [vmem:[#allocation5 + $0x460] sm:$0xff]
        %v394 = vld [vmem:[#allocation5 + $0x468] sm:$0xff]
        %v395 = vld [vmem:[#allocation5 + $0x470] sm:$0xff]
        %v396 = vld [vmem:[#allocation5 + $0x478] sm:$0xff]
        %v397 = vld [vmem:[#allocation5 + $0x480] sm:$0xff]
        %v398 = vld [vmem:[#allocation5 + $0x488] sm:$0xff]
        %v399 = vld [vmem:[#allocation5 + $0x490] sm:$0xff]
        %v400 = vld [vmem:[#allocation5 + $0x498] sm:$0xff]
        %v401 = vld [vmem:[#allocation5 + $0x4a0] sm:$0xff]
        %v402 = vld [vmem:[#allocation5 + $0x4a8] sm:$0xff]
        %v403 = vld [vmem:[#allocation5 + $0x4b0] sm:$0xff]
        %v404 = vld [vmem:[#allocation5 + $0x4b8] sm:$0xff]
        %v405 = vld [vmem:[#allocation5 + $0x4c0] sm:$0xff]
        %v406 = vld [vmem:[#allocation5 + $0x4c8] sm:$0xff]
        %v407 = vld [vmem:[#allocation5 + $0x4d0] sm:$0xff]
        %v408 = vld [vmem:[#allocation5 + $0x4d8] sm:$0xff]
        %v409 = vld [vmem:[#allocation5 + $0x4e0] sm:$0xff]
        %v410 = vld [vmem:[#allocation5 + $0x4e8] sm:$0xff]
        %v411 = vld [vmem:[#allocation5 + $0x4f0] sm:$0xff]
        %v412 = vld [vmem:[#allocation5 + $0x4f8] sm:$0xff]
        %v413 = vld [vmem:[#allocation5 + $0x500] sm:$0xff]
        %v414 = vld [vmem:[#allocation5 + $0x508] sm:$0xff]
        %v415 = vld [vmem:[#allocation5 + $0x510] sm:$0xff]
        %v416 = vld [vmem:[#allocation5 + $0x518] sm:$0xff]
        %v417 = vld [vmem:[#allocation5 + $0x520] sm:$0xff]
        %v418 = vld [vmem:[#allocation5 + $0x528] sm:$0xff]
        %v419 = vld [vmem:[#allocation5 + $0x530] sm:$0xff]
        %v420 = vld [vmem:[#allocation5 + $0x538] sm:$0xff]
        %v421 = vld [vmem:[#allocation5 + $0x540] sm:$0xff]
        %v422 = vld [vmem:[#allocation5 + $0x548] sm:$0xff]
        %v423 = vld [vmem:[#allocation5 + $0x550] sm:$0xff]
        %v424 = vld [vmem:[#allocation5 + $0x558] sm:$0xff]
        %v425 = vld [vmem:[#allocation5 + $0x560] sm:$0xff]
        %v426 = vld [vmem:[#allocation5 + $0x568] sm:$0xff]
        %v427 = vld [vmem:[#allocation5 + $0x570] sm:$0xff]
        %v428 = vld [vmem:[#allocation5 + $0x578] sm:$0xff]
        %v429 = vld [vmem:[#allocation5 + $0x580] sm:$0xff]
        %v430 = vld [vmem:[#allocation5 + $0x588] sm:$0xff]
        %v431 = vld [vmem:[#allocation5 + $0x590] sm:$0xff]
        %v432 = vld [vmem:[#allocation5 + $0x598] sm:$0xff]
        %v433 = vld [vmem:[#allocation5 + $0x5a0] sm:$0xff]
        %v434 = vld [vmem:[#allocation5 + $0x5a8] sm:$0xff]
        %v435 = vld [vmem:[#allocation5 + $0x5b0] sm:$0xff]
        %v436 = vld [vmem:[#allocation5 + $0x5b8] sm:$0xff]
        %v437 = vld [vmem:[#allocation5 + $0x5c0] sm:$0xff]
        %v438 = vld [vmem:[#allocation5 + $0x5c8] sm:$0xff]
        %v439 = vld [vmem:[#allocation5 + $0x5d0] sm:$0xff]
        %v440 = vld [vmem:[#allocation5 + $0x5d8] sm:$0xff]
        %v441 = vld [vmem:[#allocation5 + $0x5e0] sm:$0xff]
        %v442 = vld [vmem:[#allocation5 + $0x5e8] sm:$0xff]
        %v443 = vld [vmem:[#allocation5 + $0x5f0] sm:$0xff]
        %v444 = vld [vmem:[#allocation5 + $0x5f8] sm:$0xff]
        %v445 = vld [vmem:[#allocation5 + $0x600] sm:$0xff]
        %v446 = vld [vmem:[#allocation5 + $0x608] sm:$0xff]
        %v447 = vld [vmem:[#allocation5 + $0x610] sm:$0xff]
        %v448 = vld [vmem:[#allocation5 + $0x618] sm:$0xff]
        %v449 = vld [vmem:[#allocation5 + $0x620] sm:$0xff]
        %v450 = vld [vmem:[#allocation5 + $0x628] sm:$0xff]
        %v451 = vld [vmem:[#allocation5 + $0x630] sm:$0xff]
        %v452 = vld [vmem:[#allocation5 + $0x638] sm:$0xff]
        %v453 = vld [vmem:[#allocation5 + $0x640] sm:$0xff]
        %v454 = vld [vmem:[#allocation5 + $0x648] sm:$0xff]
        %v455 = vld [vmem:[#allocation5 + $0x650] sm:$0xff]
        %v456 = vld [vmem:[#allocation5 + $0x658] sm:$0xff]
        %v457 = vld [vmem:[#allocation5 + $0x660] sm:$0xff]
        %v458 = vld [vmem:[#allocation5 + $0x668] sm:$0xff]
        %v459 = vld [vmem:[#allocation5 + $0x670] sm:$0xff]
        %v460 = vld [vmem:[#allocation5 + $0x678] sm:$0xff]
        %v461 = vld [vmem:[#allocation5 + $0x680] sm:$0xff]
        %v462 = vld [vmem:[#allocation5 + $0x688] sm:$0xff]
        %v463 = vld [vmem:[#allocation5 + $0x690] sm:$0xff]
        %v464 = vld [vmem:[#allocation5 + $0x698] sm:$0xff]
        %v465 = vld [vmem:[#allocation5 + $0x6a0] sm:$0xff]
        %v466 = vld [vmem:[#allocation5 + $0x6a8] sm:$0xff]
        %v467 = vld [vmem:[#allocation5 + $0x6b0] sm:$0xff]
        %v468 = vld [vmem:[#allocation5 + $0x6b8] sm:$0xff]
        %v469 = vld [vmem:[#allocation5 + $0x6c0] sm:$0xff]
        %v470 = vld [vmem:[#allocation5 + $0x6c8] sm:$0xff]
        %v471 = vld [vmem:[#allocation5 + $0x6d0] sm:$0xff]
        %v472 = vld [vmem:[#allocation5 + $0x6d8] sm:$0xff]
        %v473 = vld [vmem:[#allocation5 + $0x6e0] sm:$0xff]
        %v474 = vld [vmem:[#allocation5 + $0x6e8] sm:$0xff]
        %v475 = vld [vmem:[#allocation5 + $0x6f0] sm:$0xff]
        %v476 = vld [vmem:[#allocation5 + $0x6f8] sm:$0xff]
        %v477 = vld [vmem:[#allocation5 + $0x700] sm:$0xff]
        %v478 = vld [vmem:[#allocation5 + $0x708] sm:$0xff]
        %v479 = vld [vmem:[#allocation5 + $0x710] sm:$0xff]
        %v480 = vld [vmem:[#allocation5 + $0x718] sm:$0xff]
        %v481 = vld [vmem:[#allocation5 + $0x720] sm:$0xff]
        %v482 = vld [vmem:[#allocation5 + $0x728] sm:$0xff]
        %v483 = vld [vmem:[#allocation5 + $0x730] sm:$0xff]
        %v484 = vld [vmem:[#allocation5 + $0x738] sm:$0xff]
        %v485 = vld [vmem:[#allocation5 + $0x740] sm:$0xff]
        %v486 = vld [vmem:[#allocation5 + $0x748] sm:$0xff]
        %v487 = vld [vmem:[#allocation5 + $0x750] sm:$0xff]
        %v488 = vld [vmem:[#allocation5 + $0x758] sm:$0xff]
        %v489 = vld [vmem:[#allocation5 + $0x760] sm:$0xff]
        %v490 = vld [vmem:[#allocation5 + $0x768] sm:$0xff]
        %v491 = vld [vmem:[#allocation5 + $0x770] sm:$0xff]
        %v492 = vld [vmem:[#allocation5 + $0x778] sm:$0xff]
        %v493 = vld [vmem:[#allocation5 + $0x780] sm:$0xff]
        %v494 = vld [vmem:[#allocation5 + $0x788] sm:$0xff]
        %v495 = vld [vmem:[#allocation5 + $0x790] sm:$0xff]
        %v496 = vld [vmem:[#allocation5 + $0x798] sm:$0xff]
        %v497 = vld [vmem:[#allocation5 + $0x7a0] sm:$0xff]
        %v498 = vld [vmem:[#allocation5 + $0x7a8] sm:$0xff]
        %v499 = vld [vmem:[#allocation5 + $0x7b0] sm:$0xff]
        %v500 = vld [vmem:[#allocation5 + $0x7b8] sm:$0xff]
        %v501 = vld [vmem:[#allocation5 + $0x7c0] sm:$0xff]
        %v502 = vld [vmem:[#allocation5 + $0x7c8] sm:$0xff]
        %v503 = vld [vmem:[#allocation5 + $0x7d0] sm:$0xff]
        %v504 = vld [vmem:[#allocation5 + $0x7d8] sm:$0xff]
        %v505 = vld [vmem:[#allocation5 + $0x7e0] sm:$0xff]
        %v506 = vld [vmem:[#allocation5 + $0x7e8] sm:$0xff]
        %v507 = vld [vmem:[#allocation5 + $0x7f0] sm:$0xff]
        %v508 = vld [vmem:[#allocation5 + $0x7f8] sm:$0xff]
        %v509 = vld [vmem:[#allocation5 + $0x800] sm:$0xff]
        %v510 = vld [vmem:[#allocation5 + $0x808] sm:$0xff]
        %v511 = vld [vmem:[#allocation5 + $0x810] sm:$0xff]
        %v512 = vld [vmem:[#allocation5 + $0x818] sm:$0xff]
        %v513 = vld [vmem:[#allocation5 + $0x820] sm:$0xff]
        %v514 = vld [vmem:[#allocation5 + $0x828] sm:$0xff]
        %v515 = vld [vmem:[#allocation5 + $0x830] sm:$0xff]
        %v516 = vld [vmem:[#allocation5 + $0x838] sm:$0xff]
        %v517 = vld [vmem:[#allocation5 + $0x840] sm:$0xff]
        %v518 = vld [vmem:[#allocation5 + $0x848] sm:$0xff]
        %v519 = vld [vmem:[#allocation5 + $0x850] sm:$0xff]
        %v520 = vld [vmem:[#allocation5 + $0x858] sm:$0xff]
        %v521 = vld [vmem:[#allocation5 + $0x860] sm:$0xff]
        %v522 = vld [vmem:[#allocation5 + $0x868] sm:$0xff]
        %v523 = vld [vmem:[#allocation5 + $0x870] sm:$0xff]
        %v524 = vld [vmem:[#allocation5 + $0x878] sm:$0xff]
        %v525 = vld [vmem:[#allocation5 + $0x880] sm:$0xff]
        %v526 = vld [vmem:[#allocation5 + $0x888] sm:$0xff]
        %v527 = vld [vmem:[#allocation5 + $0x890] sm:$0xff]
        %v528 = vld [vmem:[#allocation5 + $0x898] sm:$0xff]
        %v529 = vld [vmem:[#allocation5 + $0x8a0] sm:$0xff]
        %v530 = vld [vmem:[#allocation5 + $0x8a8] sm:$0xff]
        %v531 = vld [vmem:[#allocation5 + $0x8b0] sm:$0xff]
        %v532 = vld [vmem:[#allocation5 + $0x8b8] sm:$0xff]
        %v533 = vld [vmem:[#allocation5 + $0x8c0] sm:$0xff]
        %v534 = vld [vmem:[#allocation5 + $0x8c8] sm:$0xff]
        %v535 = vld [vmem:[#allocation5 + $0x8d0] sm:$0xff]
        %v536 = vld [vmem:[#allocation5 + $0x8d8] sm:$0xff]
        %v537 = vld [vmem:[#allocation5 + $0x8e0] sm:$0xff]
        %v538 = vld [vmem:[#allocation5 + $0x8e8] sm:$0xff]
        %v539 = vld [vmem:[#allocation5 + $0x8f0] sm:$0xff]
        %v540 = vld [vmem:[#allocation5 + $0x8f8] sm:$0xff]
        %v541 = vld [vmem:[#allocation5 + $0x900] sm:$0xff]
        %v542 = vld [vmem:[#allocation5 + $0x908] sm:$0xff]
        %v543 = vld [vmem:[#allocation5 + $0x910] sm:$0xff]
        %v544 = vld [vmem:[#allocation5 + $0x918] sm:$0xff]
        %v545 = vld [vmem:[#allocation5 + $0x920] sm:$0xff]
        %v546 = vld [vmem:[#allocation5 + $0x928] sm:$0xff]
        %v547 = vld [vmem:[#allocation5 + $0x930] sm:$0xff]
        %v548 = vld [vmem:[#allocation5 + $0x938] sm:$0xff]
        %v549 = vld [vmem:[#allocation5 + $0x940] sm:$0xff]
        %v550 = vld [vmem:[#allocation5 + $0x948] sm:$0xff]
        %v551 = vld [vmem:[#allocation5 + $0x950] sm:$0xff]
        %v552 = vld [vmem:[#allocation5 + $0x958] sm:$0xff]
        %v553 = vld [vmem:[#allocation5 + $0x960] sm:$0xff]
        %v554 = vld [vmem:[#allocation5 + $0x968] sm:$0xff]
        %v555 = vld [vmem:[#allocation5 + $0x970] sm:$0xff]
        %v556 = vld [vmem:[#allocation5 + $0x978] sm:$0xff]
        %v557 = vld [vmem:[#allocation5 + $0x980] sm:$0xff]
        %v558 = vld [vmem:[#allocation5 + $0x988] sm:$0xff]
        %v559 = vld [vmem:[#allocation5 + $0x990] sm:$0xff]
        %v560 = vld [vmem:[#allocation5 + $0x998] sm:$0xff]
        %v561 = vld [vmem:[#allocation5 + $0x9a0] sm:$0xff]
        %v562 = vld [vmem:[#allocation5 + $0x9a8] sm:$0xff]
        %v563 = vld [vmem:[#allocation5 + $0x9b0] sm:$0xff]
        %v564 = vld [vmem:[#allocation5 + $0x9b8] sm:$0xff]
        %v565 = vld [vmem:[#allocation5 + $0x9c0] sm:$0xff]
        %v566 = vld [vmem:[#allocation5 + $0x9c8] sm:$0xff]
        %v567 = vld [vmem:[#allocation5 + $0x9d0] sm:$0xff]
        %v568 = vld [vmem:[#allocation5 + $0x9d8] sm:$0xff]
        %v569 = vld [vmem:[#allocation5 + $0x9e0] sm:$0xff]
        %v570 = vld [vmem:[#allocation5 + $0x9e8] sm:$0xff]
        %v571 = vld [vmem:[#allocation5 + $0x9f0] sm:$0xff]
        %v572 = vld [vmem:[#allocation5 + $0x9f8] sm:$0xff]
        %v573 = vld [vmem:[#allocation5 + $0xa00] sm:$0xff]
        %v574 = vld [vmem:[#allocation5 + $0xa08] sm:$0xff]
        %v575 = vld [vmem:[#allocation5 + $0xa10] sm:$0xff]
        %v576 = vld [vmem:[#allocation5 + $0xa18] sm:$0xff]
        %v577 = vld [vmem:[#allocation5 + $0xa20] sm:$0xff]
        %v578 = vld [vmem:[#allocation5 + $0xa28] sm:$0xff]
        %v579 = vld [vmem:[#allocation5 + $0xa30] sm:$0xff]
        %v580 = vld [vmem:[#allocation5 + $0xa38] sm:$0xff]
        %v581 = vld [vmem:[#allocation5 + $0xa40] sm:$0xff]
        %v582 = vld [vmem:[#allocation5 + $0xa48] sm:$0xff]
        %v583 = vld [vmem:[#allocation5 + $0xa50] sm:$0xff]
        %v584 = vld [vmem:[#allocation5 + $0xa58] sm:$0xff]
        %v585 = vld [vmem:[#allocation5 + $0xa60] sm:$0xff]
        %v586 = vld [vmem:[#allocation5 + $0xa68] sm:$0xff]
        %v587 = vld [vmem:[#allocation5 + $0xa70] sm:$0xff]
        %v588 = vld [vmem:[#allocation5 + $0xa78] sm:$0xff]
        %v589 = vld [vmem:[#allocation5 + $0xa80] sm:$0xff]
        %v590 = vld [vmem:[#allocation5 + $0xa88] sm:$0xff]
        %v591 = vld [vmem:[#allocation5 + $0xa90] sm:$0xff]
        %v592 = vld [vmem:[#allocation5 + $0xa98] sm:$0xff]
        %v593 = vld [vmem:[#allocation5 + $0xaa0] sm:$0xff]
        %v594 = vld [vmem:[#allocation5 + $0xaa8] sm:$0xff]
        %v595 = vld [vmem:[#allocation5 + $0xab0] sm:$0xff]
        %v596 = vld [vmem:[#allocation5 + $0xab8] sm:$0xff]
        %v597 = vld [vmem:[#allocation5 + $0xac0] sm:$0xff]
        %v598 = vld [vmem:[#allocation5 + $0xac8] sm:$0xff]
        %v599 = vld [vmem:[#allocation5 + $0xad0] sm:$0xff]
        %v600 = vld [vmem:[#allocation5 + $0xad8] sm:$0xff]
        %v601 = vld [vmem:[#allocation5 + $0xae0] sm:$0xff]
        %v602 = vld [vmem:[#allocation5 + $0xae8] sm:$0xff]
        %v603 = vld [vmem:[#allocation5 + $0xaf0] sm:$0xff]
        %v604 = vld [vmem:[#allocation5 + $0xaf8] sm:$0xff]
        %v605 = vld [vmem:[#allocation5 + $0xb00] sm:$0xff]
        %v606 = vld [vmem:[#allocation5 + $0xb08] sm:$0xff]
        %v607 = vld [vmem:[#allocation5 + $0xb10] sm:$0xff]
        %v608 = vld [vmem:[#allocation5 + $0xb18] sm:$0xff]
        %v609 = vld [vmem:[#allocation5 + $0xb20] sm:$0xff]
        %v610 = vld [vmem:[#allocation5 + $0xb28] sm:$0xff]
        %v611 = vld [vmem:[#allocation5 + $0xb30] sm:$0xff]
        %v612 = vld [vmem:[#allocation5 + $0xb38] sm:$0xff]
        %v613 = vld [vmem:[#allocation5 + $0xb40] sm:$0xff]
        %v614 = vld [vmem:[#allocation5 + $0xb48] sm:$0xff]
        %v615 = vld [vmem:[#allocation5 + $0xb50] sm:$0xff]
        %v616 = vld [vmem:[#allocation5 + $0xb58] sm:$0xff]
        %v617 = vld [vmem:[#allocation5 + $0xb60] sm:$0xff]
        %v618 = vld [vmem:[#allocation5 + $0xb68] sm:$0xff]
        %v619 = vld [vmem:[#allocation5 + $0xb70] sm:$0xff]
        %v620 = vld [vmem:[#allocation5 + $0xb78] sm:$0xff]
        %v621 = vld [vmem:[#allocation5 + $0xb80] sm:$0xff]
        %v622 = vld [vmem:[#allocation5 + $0xb88] sm:$0xff]
        %v623 = vld [vmem:[#allocation5 + $0xb90] sm:$0xff]
        %v624 = vld [vmem:[#allocation5 + $0xb98] sm:$0xff]
        %v625 = vld [vmem:[#allocation5 + $0xba0] sm:$0xff]
        %v626 = vld [vmem:[#allocation5 + $0xba8] sm:$0xff]
        %v627 = vld [vmem:[#allocation5 + $0xbb0] sm:$0xff]
        %v628 = vld [vmem:[#allocation5 + $0xbb8] sm:$0xff]
        %v629 = vld [vmem:[#allocation5 + $0xbc0] sm:$0xff]
        %v630 = vld [vmem:[#allocation5 + $0xbc8] sm:$0xff]
        %v631 = vld [vmem:[#allocation5 + $0xbd0] sm:$0xff]
        %v632 = vld [vmem:[#allocation5 + $0xbd8] sm:$0xff]
        %v633 = vld [vmem:[#allocation5 + $0xbe0] sm:$0xff]
        %v634 = vld [vmem:[#allocation5 + $0xbe8] sm:$0xff]
        %v635 = vld [vmem:[#allocation5 + $0xbf0] sm:$0xff]
        %v636 = vld [vmem:[#allocation5 + $0xbf8] sm:$0xff]
        %v637 = vld [vmem:[#allocation5 + $0xc00] sm:$0xff]
        %v638 = vld [vmem:[#allocation5 + $0xc08] sm:$0xff]
        %v639 = vld [vmem:[#allocation5 + $0xc10] sm:$0xff]
        %v640 = vld [vmem:[#allocation5 + $0xc18] sm:$0xff]
        %v641 = vld [vmem:[#allocation5 + $0xc20] sm:$0xff]
        %v642 = vld [vmem:[#allocation5 + $0xc28] sm:$0xff]
        %v643 = vld [vmem:[#allocation5 + $0xc30] sm:$0xff]
        %v644 = vld [vmem:[#allocation5 + $0xc38] sm:$0xff]
        %v645 = vld [vmem:[#allocation5 + $0xc40] sm:$0xff]
        %v646 = vld [vmem:[#allocation5 + $0xc48] sm:$0xff]
        %v647 = vld [vmem:[#allocation5 + $0xc50] sm:$0xff]
        %v648 = vld [vmem:[#allocation5 + $0xc58] sm:$0xff]
        %v649 = vld [vmem:[#allocation5 + $0xc60] sm:$0xff]
        %v650 = vld [vmem:[#allocation5 + $0xc68] sm:$0xff]
        %v651 = vld [vmem:[#allocation5 + $0xc70] sm:$0xff]
        %v652 = vld [vmem:[#allocation5 + $0xc78] sm:$0xff]
        %v653 = vld [vmem:[#allocation5 + $0xc80] sm:$0xff]
        %v654 = vld [vmem:[#allocation5 + $0xc88] sm:$0xff]
        %v655 = vld [vmem:[#allocation5 + $0xc90] sm:$0xff]
        %v656 = vld [vmem:[#allocation5 + $0xc98] sm:$0xff]
        %v657 = vld [vmem:[#allocation5 + $0xca0] sm:$0xff]
        %v658 = vld [vmem:[#allocation5 + $0xca8] sm:$0xff]
        %v659 = vld [vmem:[#allocation5 + $0xcb0] sm:$0xff]
        %v660 = vld [vmem:[#allocation5 + $0xcb8] sm:$0xff]
        %v661 = vld [vmem:[#allocation5 + $0xcc0] sm:$0xff]
        %v662 = vld [vmem:[#allocation5 + $0xcc8] sm:$0xff]
        %v663 = vld [vmem:[#allocation5 + $0xcd0] sm:$0xff]
        %v664 = vld [vmem:[#allocation5 + $0xcd8] sm:$0xff]
        %v665 = vld [vmem:[#allocation5 + $0xce0] sm:$0xff]
        %v666 = vld [vmem:[#allocation5 + $0xce8] sm:$0xff]
        %v667 = vld [vmem:[#allocation5 + $0xcf0] sm:$0xff]
        %v668 = vld [vmem:[#allocation5 + $0xcf8] sm:$0xff]
        %v669 = vld [vmem:[#allocation5 + $0xd00] sm:$0xff]
        %v670 = vld [vmem:[#allocation5 + $0xd08] sm:$0xff]
        %v671 = vld [vmem:[#allocation5 + $0xd10] sm:$0xff]
        %v672 = vld [vmem:[#allocation5 + $0xd18] sm:$0xff]
        %v673 = vld [vmem:[#allocation5 + $0xd20] sm:$0xff]
        %v674 = vld [vmem:[#allocation5 + $0xd28] sm:$0xff]
        %v675 = vld [vmem:[#allocation5 + $0xd30] sm:$0xff]
        %v676 = vld [vmem:[#allocation5 + $0xd38] sm:$0xff]
        %v677 = vld [vmem:[#allocation5 + $0xd40] sm:$0xff]
        %v678 = vld [vmem:[#allocation5 + $0xd48] sm:$0xff]
        %v679 = vld [vmem:[#allocation5 + $0xd50] sm:$0xff]
        %v680 = vld [vmem:[#allocation5 + $0xd58] sm:$0xff]
        %v681 = vld [vmem:[#allocation5 + $0xd60] sm:$0xff]
        %v682 = vld [vmem:[#allocation5 + $0xd68] sm:$0xff]
        %v683 = vld [vmem:[#allocation5 + $0xd70] sm:$0xff]
        %v684 = vld [vmem:[#allocation5 + $0xd78] sm:$0xff]
        %v685 = vld [vmem:[#allocation5 + $0xd80] sm:$0xff]
        %v686 = vld [vmem:[#allocation5 + $0xd88] sm:$0xff]
        %v687 = vld [vmem:[#allocation5 + $0xd90] sm:$0xff]
        %v688 = vld [vmem:[#allocation5 + $0xd98] sm:$0xff]
        %v689 = vld [vmem:[#allocation5 + $0xda0] sm:$0xff]
        %v690 = vld [vmem:[#allocation5 + $0xda8] sm:$0xff]
        %v691 = vld [vmem:[#allocation5 + $0xdb0] sm:$0xff]
        %v692 = vld [vmem:[#allocation5 + $0xdb8] sm:$0xff]
        %v693 = vld [vmem:[#allocation5 + $0xdc0] sm:$0xff]
        %v694 = vld [vmem:[#allocation5 + $0xdc8] sm:$0xff]
        %v695 = vld [vmem:[#allocation5 + $0xdd0] sm:$0xff]
        %v696 = vld [vmem:[#allocation5 + $0xdd8] sm:$0xff]
        %v697 = vld [vmem:[#allocation5 + $0xde0] sm:$0xff]
        %v698 = vld [vmem:[#allocation5 + $0xde8] sm:$0xff]
        %v699 = vld [vmem:[#allocation5 + $0xdf0] sm:$0xff]
        %v700 = vld [vmem:[#allocation5 + $0xdf8] sm:$0xff]
        %v701 = vld [vmem:[#allocation5 + $0xe00] sm:$0xff]
        %v702 = vld [vmem:[#allocation5 + $0xe08] sm:$0xff]
        %v703 = vld [vmem:[#allocation5 + $0xe10] sm:$0xff]
        %v704 = vld [vmem:[#allocation5 + $0xe18] sm:$0xff]
        %v705 = vld [vmem:[#allocation5 + $0xe20] sm:$0xff]
        %v706 = vld [vmem:[#allocation5 + $0xe28] sm:$0xff]
        %v707 = vld [vmem:[#allocation5 + $0xe30] sm:$0xff]
        %v708 = vld [vmem:[#allocation5 + $0xe38] sm:$0xff]
        %v709 = vld [vmem:[#allocation5 + $0xe40] sm:$0xff]
        %v710 = vld [vmem:[#allocation5 + $0xe48] sm:$0xff]
        %v711 = vld [vmem:[#allocation5 + $0xe50] sm:$0xff]
        %v712 = vld [vmem:[#allocation5 + $0xe58] sm:$0xff]
        %v713 = vld [vmem:[#allocation5 + $0xe60] sm:$0xff]
        %v714 = vld [vmem:[#allocation5 + $0xe68] sm:$0xff]
        %v715 = vld [vmem:[#allocation5 + $0xe70] sm:$0xff]
        %v716 = vld [vmem:[#allocation5 + $0xe78] sm:$0xff]
        %v717 = vld [vmem:[#allocation5 + $0xe80] sm:$0xff]
        %v718 = vld [vmem:[#allocation5 + $0xe88] sm:$0xff]
        %v719 = vld [vmem:[#allocation5 + $0xe90] sm:$0xff]
        %v720 = vld [vmem:[#allocation5 + $0xe98] sm:$0xff]
        %v721 = vld [vmem:[#allocation5 + $0xea0] sm:$0xff]
        %v722 = vld [vmem:[#allocation5 + $0xea8] sm:$0xff]
        %v723 = vld [vmem:[#allocation5 + $0xeb0] sm:$0xff]
        %v724 = vld [vmem:[#allocation5 + $0xeb8] sm:$0xff]
        %v725 = vld [vmem:[#allocation5 + $0xec0] sm:$0xff]
        %v726 = vld [vmem:[#allocation5 + $0xec8] sm:$0xff]
        %v727 = vld [vmem:[#allocation5 + $0xed0] sm:$0xff]
        %v728 = vld [vmem:[#allocation5 + $0xed8] sm:$0xff]
        %v729 = vld [vmem:[#allocation5 + $0xee0] sm:$0xff]
        %v730 = vld [vmem:[#allocation5 + $0xee8] sm:$0xff]
        %v731 = vld [vmem:[#allocation5 + $0xef0] sm:$0xff]
        %v732 = vld [vmem:[#allocation5 + $0xef8] sm:$0xff]
        %v733 = vld [vmem:[#allocation5 + $0xf00] sm:$0xff]
        %v734 = vld [vmem:[#allocation5 + $0xf08] sm:$0xff]
        %v735 = vld [vmem:[#allocation5 + $0xf10] sm:$0xff]
        %v736 = vld [vmem:[#allocation5 + $0xf18] sm:$0xff]
        %v737 = vld [vmem:[#allocation5 + $0xf20] sm:$0xff]
        %v738 = vld [vmem:[#allocation5 + $0xf28] sm:$0xff]
        %v739 = vld [vmem:[#allocation5 + $0xf30] sm:$0xff]
        %v740 = vld [vmem:[#allocation5 + $0xf38] sm:$0xff]
        %v741 = vld [vmem:[#allocation5 + $0xf40] sm:$0xff]
        %v742 = vld [vmem:[#allocation5 + $0xf48] sm:$0xff]
        %v743 = vld [vmem:[#allocation5 + $0xf50] sm:$0xff]
        %v744 = vld [vmem:[#allocation5 + $0xf58] sm:$0xff]
        %v745 = vld [vmem:[#allocation5 + $0xf60] sm:$0xff]
        %v746 = vld [vmem:[#allocation5 + $0xf68] sm:$0xff]
        %v747 = vld [vmem:[#allocation5 + $0xf70] sm:$0xff]
        %v748 = vld [vmem:[#allocation5 + $0xf78] sm:$0xff]
        %v749 = vld [vmem:[#allocation5 + $0xf80] sm:$0xff]
        %v750 = vld [vmem:[#allocation5 + $0xf88] sm:$0xff]
        %v751 = vld [vmem:[#allocation5 + $0xf90] sm:$0xff]
        %v752 = vld [vmem:[#allocation5 + $0xf98] sm:$0xff]
        %v753 = vld [vmem:[#allocation5 + $0xfa0] sm:$0xff]
        %v754 = vld [vmem:[#allocation5 + $0xfa8] sm:$0xff]
        %v755 = vld [vmem:[#allocation5 + $0xfb0] sm:$0xff]
        %v756 = vld [vmem:[#allocation5 + $0xfb8] sm:$0xff]
        %v757 = vld [vmem:[#allocation5 + $0xfc0] sm:$0xff]
        %v758 = vld [vmem:[#allocation5 + $0xfc8] sm:$0xff]
        %v759 = vld [vmem:[#allocation5 + $0xfd0] sm:$0xff]
        %v760 = vld [vmem:[#allocation5 + $0xfd8] sm:$0xff]
        %v761 = vld [vmem:[#allocation5 + $0xfe0] sm:$0xff]
        %v762 = vld [vmem:[#allocation5 + $0xfe8] sm:$0xff]
        %v763 = vld [vmem:[#allocation5 + $0xff0] sm:$0xff]
        %v764 = vld [vmem:[#allocation5 + $0xff8] sm:$0xff]
        %v765 = vld [vmem:[#allocation5 + $0x1000] sm:$0xff]
        %v766 = vld [vmem:[#allocation5 + $0x1008] sm:$0xff]
        %v767 = vld [vmem:[#allocation5 + $0x1010] sm:$0xff]
        %v768 = vld [vmem:[#allocation5 + $0x1018] sm:$0xff]
        %v769 = vld [vmem:[#allocation5 + $0x1020] sm:$0xff]
        %v770 = vld [vmem:[#allocation5 + $0x1028] sm:$0xff]
        %v771 = vld [vmem:[#allocation5 + $0x1030] sm:$0xff]
        %v772 = vld [vmem:[#allocation5 + $0x1038] sm:$0xff]
        %v773 = vld [vmem:[#allocation5 + $0x1040] sm:$0xff]
        %v774 = vld [vmem:[#allocation5 + $0x1048] sm:$0xff]
        %v775 = vld [vmem:[#allocation5 + $0x1050] sm:$0xff]
        %v776 = vld [vmem:[#allocation5 + $0x1058] sm:$0xff]
        %v777 = vld [vmem:[#allocation5 + $0x1060] sm:$0xff]
        %v778 = vld [vmem:[#allocation5 + $0x1068] sm:$0xff]
        %v779 = vld [vmem:[#allocation5 + $0x1070] sm:$0xff]
        %v780 = vld [vmem:[#allocation5 + $0x1078] sm:$0xff]
        %v781 = vld [vmem:[#allocation5 + $0x1080] sm:$0xff]
        %v782 = vld [vmem:[#allocation5 + $0x1088] sm:$0xff]
        %v783 = vld [vmem:[#allocation5 + $0x1090] sm:$0xff]
        %v784 = vld [vmem:[#allocation5 + $0x1098] sm:$0xff]
        %v785 = vld [vmem:[#allocation5 + $0x10a0] sm:$0xff]
        %v786 = vld [vmem:[#allocation5 + $0x10a8] sm:$0xff]
        %v787 = vld [vmem:[#allocation5 + $0x10b0] sm:$0xff]
        %v788 = vld [vmem:[#allocation5 + $0x10b8] sm:$0xff]
        %v789 = vld [vmem:[#allocation5 + $0x10c0] sm:$0xff]
        %v790 = vld [vmem:[#allocation5 + $0x10c8] sm:$0xff]
        %v791 = vld [vmem:[#allocation5 + $0x10d0] sm:$0xff]
        %v792 = vld [vmem:[#allocation5 + $0x10d8] sm:$0xff]
        %v793 = vld [vmem:[#allocation5 + $0x10e0] sm:$0xff]
        %v794 = vld [vmem:[#allocation5 + $0x10e8] sm:$0xff]
        %v795 = vld [vmem:[#allocation5 + $0x10f0] sm:$0xff]
        %v796 = vld [vmem:[#allocation5 + $0x10f8] sm:$0xff]
        %v797 = vld [vmem:[#allocation5 + $0x1100] sm:$0xff]
        %v798 = vld [vmem:[#allocation5 + $0x1108] sm:$0xff]
        %v799 = vld [vmem:[#allocation5 + $0x1110] sm:$0xff]
        %v800 = vld [vmem:[#allocation5 + $0x1118] sm:$0xff]
        %v801 = vld [vmem:[#allocation5 + $0x1120] sm:$0xff]
        %v802 = vld [vmem:[#allocation5 + $0x1128] sm:$0xff]
        %v803 = vld [vmem:[#allocation5 + $0x1130] sm:$0xff]
        %v804 = vld [vmem:[#allocation5 + $0x1138] sm:$0xff]
        %v805 = vld [vmem:[#allocation5 + $0x1140] sm:$0xff]
        %v806 = vld [vmem:[#allocation5 + $0x1148] sm:$0xff]
        %v807 = vld [vmem:[#allocation5 + $0x1150] sm:$0xff]
        %v808 = vld [vmem:[#allocation5 + $0x1158] sm:$0xff]
        %v809 = vld [vmem:[#allocation5 + $0x1160] sm:$0xff]
        %v810 = vld [vmem:[#allocation5 + $0x1168] sm:$0xff]
        %v811 = vld [vmem:[#allocation5 + $0x1170] sm:$0xff]
        %v812 = vld [vmem:[#allocation5 + $0x1178] sm:$0xff]
        %v813 = vld [vmem:[#allocation5 + $0x1180] sm:$0xff]
        %v814 = vld [vmem:[#allocation5 + $0x1188] sm:$0xff]
        %v815 = vld [vmem:[#allocation5 + $0x1190] sm:$0xff]
        %v816 = vld [vmem:[#allocation5 + $0x1198] sm:$0xff]
        %v817 = vld [vmem:[#allocation5 + $0x11a0] sm:$0xff]
        %v818 = vld [vmem:[#allocation5 + $0x11a8] sm:$0xff]
        %v819 = vld [vmem:[#allocation5 + $0x11b0] sm:$0xff]
        %v820 = vld [vmem:[#allocation5 + $0x11b8] sm:$0xff]
        %v821 = vld [vmem:[#allocation5 + $0x11c0] sm:$0xff]
        %v822 = vld [vmem:[#allocation5 + $0x11c8] sm:$0xff]
        %v823 = vld [vmem:[#allocation5 + $0x11d0] sm:$0xff]
        %v824 = vld [vmem:[#allocation5 + $0x11d8] sm:$0xff]
        %v825 = vld [vmem:[#allocation5 + $0x11e0] sm:$0xff]
        %v826 = vld [vmem:[#allocation5 + $0x11e8] sm:$0xff]
        %v827 = vld [vmem:[#allocation5 + $0x11f0] sm:$0xff]
        %v828 = vld [vmem:[#allocation5 + $0x11f8] sm:$0xff]
        %v829 = vld [vmem:[#allocation5 + $0x1200] sm:$0xff]
        %v830 = vld [vmem:[#allocation5 + $0x1208] sm:$0xff]
        %v831 = vld [vmem:[#allocation5 + $0x1210] sm:$0xff]
        %v832 = vld [vmem:[#allocation5 + $0x1218] sm:$0xff]
        %v833 = vld [vmem:[#allocation5 + $0x1220] sm:$0xff]
        %v834 = vld [vmem:[#allocation5 + $0x1228] sm:$0xff]
        %v835 = vld [vmem:[#allocation5 + $0x1230] sm:$0xff]
        %v836 = vld [vmem:[#allocation5 + $0x1238] sm:$0xff]
        %v837 = vld [vmem:[#allocation5 + $0x1240] sm:$0xff]
        %v838 = vld [vmem:[#allocation5 + $0x1248] sm:$0xff]
        %v839 = vld [vmem:[#allocation5 + $0x1250] sm:$0xff]
        %v840 = vld [vmem:[#allocation5 + $0x1258] sm:$0xff]
        %v841 = vld [vmem:[#allocation5 + $0x1260] sm:$0xff]
        %v842 = vld [vmem:[#allocation5 + $0x1268] sm:$0xff]
        %v843 = vld [vmem:[#allocation5 + $0x1270] sm:$0xff]
        %v844 = vld [vmem:[#allocation5 + $0x1278] sm:$0xff]
        %v845 = vld [vmem:[#allocation5 + $0x1280] sm:$0xff]
        %v846 = vld [vmem:[#allocation5 + $0x1288] sm:$0xff]
        %v847 = vld [vmem:[#allocation5 + $0x1290] sm:$0xff]
        %v848 = vld [vmem:[#allocation5 + $0x1298] sm:$0xff]
        %v849 = vld [vmem:[#allocation5 + $0x12a0] sm:$0xff]
        %v850 = vld [vmem:[#allocation5 + $0x12a8] sm:$0xff]
        %v851 = vld [vmem:[#allocation5 + $0x12b0] sm:$0xff]
        %v852 = vld [vmem:[#allocation5 + $0x12b8] sm:$0xff]
        %v853 = vld [vmem:[#allocation5 + $0x12c0] sm:$0xff]
        %v854 = vld [vmem:[#allocation5 + $0x12c8] sm:$0xff]
        %v855 = vld [vmem:[#allocation5 + $0x12d0] sm:$0xff]
        %v856 = vld [vmem:[#allocation5 + $0x12d8] sm:$0xff]
        %v857 = vld [vmem:[#allocation5 + $0x12e0] sm:$0xff]
        %v858 = vld [vmem:[#allocation5 + $0x12e8] sm:$0xff]
        %v859 = vld [vmem:[#allocation5 + $0x12f0] sm:$0xff]
        %v860 = vld [vmem:[#allocation5 + $0x12f8] sm:$0xff]
        %v861 = vld [vmem:[#allocation5 + $0x1300] sm:$0xff]
        %v862 = vld [vmem:[#allocation5 + $0x1308] sm:$0xff]
        %v863 = vld [vmem:[#allocation5 + $0x1310] sm:$0xff]
        %v864 = vld [vmem:[#allocation5 + $0x1318] sm:$0xff]
        %v865 = vld [vmem:[#allocation5 + $0x1320] sm:$0xff]
        %v866 = vld [vmem:[#allocation5 + $0x1328] sm:$0xff]
        %v867 = vld [vmem:[#allocation5 + $0x1330] sm:$0xff]
        %v868 = vld [vmem:[#allocation5 + $0x1338] sm:$0xff]
        %v869 = vld [vmem:[#allocation5 + $0x1340] sm:$0xff]
        %v870 = vld [vmem:[#allocation5 + $0x1348] sm:$0xff]
        %v871 = vld [vmem:[#allocation5 + $0x1350] sm:$0xff]
        %v872 = vld [vmem:[#allocation5 + $0x1358] sm:$0xff]
        %v873 = vld [vmem:[#allocation5 + $0x1360] sm:$0xff]
        %v874 = vld [vmem:[#allocation5 + $0x1368] sm:$0xff]
        %v875 = vld [vmem:[#allocation5 + $0x1370] sm:$0xff]
        %v876 = vld [vmem:[#allocation5 + $0x1378] sm:$0xff]
        %v877 = vld [vmem:[#allocation5 + $0x1380] sm:$0xff]
        %v878 = vld [vmem:[#allocation5 + $0x1388] sm:$0xff]
        %v879 = vld [vmem:[#allocation5 + $0x1390] sm:$0xff]
        %v880 = vld [vmem:[#allocation5 + $0x1398] sm:$0xff]
        %v881 = vld [vmem:[#allocation5 + $0x13a0] sm:$0xff]
        %v882 = vld [vmem:[#allocation5 + $0x13a8] sm:$0xff]
        %v883 = vld [vmem:[#allocation5 + $0x13b0] sm:$0xff]
        %v884 = vld [vmem:[#allocation5 + $0x13b8] sm:$0xff]
        %v885 = vld [vmem:[#allocation5 + $0x13c0] sm:$0xff]
        %v886 = vld [vmem:[#allocation5 + $0x13c8] sm:$0xff]
        %v887 = vld [vmem:[#allocation5 + $0x13d0] sm:$0xff]
        %v888 = vld [vmem:[#allocation5 + $0x13d8] sm:$0xff]
        %v889 = vld [vmem:[#allocation5 + $0x13e0] sm:$0xff]
        %v890 = vld [vmem:[#allocation5 + $0x13e8] sm:$0xff]
        %v891 = vld [vmem:[#allocation5 + $0x13f0] sm:$0xff]
        %v892 = vld [vmem:[#allocation5 + $0x13f8] sm:$0xff]
        %v893 = vld [vmem:[#allocation5 + $0x1400] sm:$0xff]
        %v894 = vld [vmem:[#allocation5 + $0x1408] sm:$0xff]
        %v895 = vld [vmem:[#allocation5 + $0x1410] sm:$0xff]
        %v896 = vld [vmem:[#allocation5 + $0x1418] sm:$0xff]
        %v897 = vld [vmem:[#allocation5 + $0x1420] sm:$0xff]
        %v898 = vld [vmem:[#allocation5 + $0x1428] sm:$0xff]
        %v899 = vld [vmem:[#allocation5 + $0x1430] sm:$0xff]
        %v900 = vld [vmem:[#allocation5 + $0x1438] sm:$0xff]
        %v901 = vld [vmem:[#allocation5 + $0x1440] sm:$0xff]
        %v902 = vld [vmem:[#allocation5 + $0x1448] sm:$0xff]
        %v903 = vld [vmem:[#allocation5 + $0x1450] sm:$0xff]
        %v904 = vld [vmem:[#allocation5 + $0x1458] sm:$0xff]
        %v905 = vld [vmem:[#allocation5 + $0x1460] sm:$0xff]
        %v906 = vld [vmem:[#allocation5 + $0x1468] sm:$0xff]
        %v907 = vld [vmem:[#allocation5 + $0x1470] sm:$0xff]
        %v908 = vld [vmem:[#allocation5 + $0x1478] sm:$0xff]
        %v909 = vld [vmem:[#allocation5 + $0x1480] sm:$0xff]
        %v910 = vld [vmem:[#allocation5 + $0x1488] sm:$0xff]
        %v911 = vld [vmem:[#allocation5 + $0x1490] sm:$0xff]
        %v912 = vld [vmem:[#allocation5 + $0x1498] sm:$0xff]
        %v913 = vld [vmem:[#allocation5 + $0x14a0] sm:$0xff]
        %v914 = vld [vmem:[#allocation5 + $0x14a8] sm:$0xff]
        %v915 = vld [vmem:[#allocation5 + $0x14b0] sm:$0xff]
        %v916 = vld [vmem:[#allocation5 + $0x14b8] sm:$0xff]
        %v917 = vld [vmem:[#allocation5 + $0x14c0] sm:$0xff]
        %v918 = vld [vmem:[#allocation5 + $0x14c8] sm:$0xff]
        %v919 = vld [vmem:[#allocation5 + $0x14d0] sm:$0xff]
        %v920 = vld [vmem:[#allocation5 + $0x14d8] sm:$0xff]
        %v921 = vld [vmem:[#allocation5 + $0x14e0] sm:$0xff]
        %v922 = vld [vmem:[#allocation5 + $0x14e8] sm:$0xff]
        %v923 = vld [vmem:[#allocation5 + $0x14f0] sm:$0xff]
        %v924 = vld [vmem:[#allocation5 + $0x14f8] sm:$0xff]
        %v925 = vld [vmem:[#allocation5 + $0x1500] sm:$0xff]
        %v926 = vld [vmem:[#allocation5 + $0x1508] sm:$0xff]
        %v927 = vld [vmem:[#allocation5 + $0x1510] sm:$0xff]
        %v928 = vld [vmem:[#allocation5 + $0x1518] sm:$0xff]
        %v929 = vld [vmem:[#allocation5 + $0x1520] sm:$0xff]
        %v930 = vld [vmem:[#allocation5 + $0x1528] sm:$0xff]
        %v931 = vld [vmem:[#allocation5 + $0x1530] sm:$0xff]
        %v932 = vld [vmem:[#allocation5 + $0x1538] sm:$0xff]
        %v933 = vld [vmem:[#allocation5 + $0x1540] sm:$0xff]
        %v934 = vld [vmem:[#allocation5 + $0x1548] sm:$0xff]
        %v935 = vld [vmem:[#allocation5 + $0x1550] sm:$0xff]
        %v936 = vld [vmem:[#allocation5 + $0x1558] sm:$0xff]
        %v937 = vld [vmem:[#allocation5 + $0x1560] sm:$0xff]
        %v938 = vld [vmem:[#allocation5 + $0x1568] sm:$0xff]
        %v939 = vld [vmem:[#allocation5 + $0x1570] sm:$0xff]
        %v940 = vld [vmem:[#allocation5 + $0x1578] sm:$0xff]
        %v941 = vld [vmem:[#allocation5 + $0x1580] sm:$0xff]
        %v942 = vld [vmem:[#allocation5 + $0x1588] sm:$0xff]
        %v943 = vld [vmem:[#allocation5 + $0x1590] sm:$0xff]
        %v944 = vld [vmem:[#allocation5 + $0x1598] sm:$0xff]
        %v945 = vld [vmem:[#allocation5 + $0x15a0] sm:$0xff]
        %v946 = vld [vmem:[#allocation5 + $0x15a8] sm:$0xff]
        %v947 = vld [vmem:[#allocation5 + $0x15b0] sm:$0xff]
        %v948 = vld [vmem:[#allocation5 + $0x15b8] sm:$0xff]
        %v949 = vld [vmem:[#allocation5 + $0x15c0] sm:$0xff]
        %v950 = vld [vmem:[#allocation5 + $0x15c8] sm:$0xff]
        %v951 = vld [vmem:[#allocation5 + $0x15d0] sm:$0xff]
        %v952 = vld [vmem:[#allocation5 + $0x15d8] sm:$0xff]
        %v953 = vld [vmem:[#allocation5 + $0x15e0] sm:$0xff]
        %v954 = vld [vmem:[#allocation5 + $0x15e8] sm:$0xff]
        %v955 = vld [vmem:[#allocation5 + $0x15f0] sm:$0xff]
        %v956 = vld [vmem:[#allocation5 + $0x15f8] sm:$0xff]
        %v957 = vld [vmem:[#allocation5 + $0x1600] sm:$0xff]
        %v958 = vld [vmem:[#allocation5 + $0x1608] sm:$0xff]
        %v959 = vld [vmem:[#allocation5 + $0x1610] sm:$0xff]
        %v960 = vld [vmem:[#allocation5 + $0x1618] sm:$0xff]
        %v961 = vld [vmem:[#allocation5 + $0x1620] sm:$0xff]
        %v962 = vld [vmem:[#allocation5 + $0x1628] sm:$0xff]
        %v963 = vld [vmem:[#allocation5 + $0x1630] sm:$0xff]
        %v964 = vld [vmem:[#allocation5 + $0x1638] sm:$0xff]
        %v965 = vld [vmem:[#allocation5 + $0x1640] sm:$0xff]
        %v966 = vld [vmem:[#allocation5 + $0x1648] sm:$0xff]
        %v967 = vld [vmem:[#allocation5 + $0x1650] sm:$0xff]
        %v968 = vld [vmem:[#allocation5 + $0x1658] sm:$0xff]
        %v969 = vld [vmem:[#allocation5 + $0x1660] sm:$0xff]
        %v970 = vld [vmem:[#allocation5 + $0x1668] sm:$0xff]
        %v971 = vld [vmem:[#allocation5 + $0x1670] sm:$0xff]
        %v972 = vld [vmem:[#allocation5 + $0x1678] sm:$0xff]
        %v973 = vld [vmem:[#allocation5 + $0x1680] sm:$0xff]
        %v974 = vld [vmem:[#allocation5 + $0x1688] sm:$0xff]
        %v975 = vld [vmem:[#allocation5 + $0x1690] sm:$0xff]
        %v976 = vld [vmem:[#allocation5 + $0x1698] sm:$0xff]
        %v977 = vld [vmem:[#allocation5 + $0x16a0] sm:$0xff]
        %v978 = vld [vmem:[#allocation5 + $0x16a8] sm:$0xff]
        %v979 = vld [vmem:[#allocation5 + $0x16b0] sm:$0xff]
        %v980 = vld [vmem:[#allocation5 + $0x16b8] sm:$0xff]
        %v981 = vld [vmem:[#allocation5 + $0x16c0] sm:$0xff]
        %v982 = vld [vmem:[#allocation5 + $0x16c8] sm:$0xff]
        %v983 = vld [vmem:[#allocation5 + $0x16d0] sm:$0xff]
        %v984 = vld [vmem:[#allocation5 + $0x16d8] sm:$0xff]
        %v985 = vld [vmem:[#allocation5 + $0x16e0] sm:$0xff]
        %v986 = vld [vmem:[#allocation5 + $0x16e8] sm:$0xff]
        %v987 = vld [vmem:[#allocation5 + $0x16f0] sm:$0xff]
        %v988 = vld [vmem:[#allocation5 + $0x16f8] sm:$0xff]
        %v989 = vld [vmem:[#allocation5 + $0x1700] sm:$0xff]
        %v990 = vld [vmem:[#allocation5 + $0x1708] sm:$0xff]
        %v991 = vld [vmem:[#allocation5 + $0x1710] sm:$0xff]
        %v992 = vld [vmem:[#allocation5 + $0x1718] sm:$0xff]
        %v993 = vld [vmem:[#allocation5 + $0x1720] sm:$0xff]
        %v994 = vld [vmem:[#allocation5 + $0x1728] sm:$0xff]
        %v995 = vld [vmem:[#allocation5 + $0x1730] sm:$0xff]
        %v996 = vld [vmem:[#allocation5 + $0x1738] sm:$0xff]
        %v997 = vld [vmem:[#allocation5 + $0x1740] sm:$0xff]
        %v998 = vld [vmem:[#allocation5 + $0x1748] sm:$0xff]
        %v999 = vld [vmem:[#allocation5 + $0x1750] sm:$0xff]
        %v1000 = vld [vmem:[#allocation5 + $0x1758] sm:$0xff]
        %v1001 = vld [vmem:[#allocation5 + $0x1760] sm:$0xff]
        %v1002 = vld [vmem:[#allocation5 + $0x1768] sm:$0xff]
        %v1003 = vld [vmem:[#allocation5 + $0x1770] sm:$0xff]
        %v1004 = vld [vmem:[#allocation5 + $0x1778] sm:$0xff]
        %v1005 = vld [vmem:[#allocation5 + $0x1780] sm:$0xff]
        %v1006 = vld [vmem:[#allocation5 + $0x1788] sm:$0xff]
        %v1007 = vld [vmem:[#allocation5 + $0x1790] sm:$0xff]
        %v1008 = vld [vmem:[#allocation5 + $0x1798] sm:$0xff]
        %v1009 = vld [vmem:[#allocation5 + $0x17a0] sm:$0xff]
        %v1010 = vld [vmem:[#allocation5 + $0x17a8] sm:$0xff]
        %v1011 = vld [vmem:[#allocation5 + $0x17b0] sm:$0xff]
        %v1012 = vld [vmem:[#allocation5 + $0x17b8] sm:$0xff]
        %v1013 = vld [vmem:[#allocation5 + $0x17c0] sm:$0xff]
        %v1014 = vld [vmem:[#allocation5 + $0x17c8] sm:$0xff]
        %v1015 = vld [vmem:[#allocation5 + $0x17d0] sm:$0xff]
        %v1016 = vld [vmem:[#allocation5 + $0x17d8] sm:$0xff]
        %v1017 = vld [vmem:[#allocation5 + $0x17e0] sm:$0xff]
        %v1018 = vld [vmem:[#allocation5 + $0x17e8] sm:$0xff]
        %v1019 = vld [vmem:[#allocation5 + $0x17f0] sm:$0xff]
        %v1020 = vld [vmem:[#allocation5 + $0x17f8] sm:$0xff]
        %1021 = vmatprep.subr.mxu0 %v254
        %1022 = vmatpush1.msra.mxu0 %v253
        %1023 = vmatprep.subr.mxu0 %v260
        %1024 = vmatpush1.msra.mxu0 %v259
        %1025 = vmatprep.subr.mxu0 %v266
        %1026 = vmatpush1.msra.mxu0 %v265
        %1027 = vmatprep.subr.mxu0 %v272
        %1028 = vmatpush1.msra.mxu0 %v271
        %1029 = vmatprep.subr.mxu0 %v278
        %1030 = vmatpush1.msra.mxu0 %v277
        %1031 = vmatprep.subr.mxu0 %v284
        %1032 = vmatpush1.msra.mxu0 %v283
        %1033 = vmatprep.subr.mxu0 %v290
        %1034 = vmatpush1.msra.mxu0 %v289
        %1035 = vmatprep.subr.mxu0 %v296
        %1036 = vmatpush1.msra.mxu0 %v295
        %1037 = vmatprep.subr.mxu0 %v302
        %1038 = vmatpush1.msra.mxu0 %v301
        %1039 = vmatprep.subr.mxu0 %v308
        %1040 = vmatpush1.msra.mxu0 %v307
        %1041 = vmatprep.subr.mxu0 %v314
        %1042 = vmatpush1.msra.mxu0 %v313
        %1043 = vmatprep.subr.mxu0 %v320
        %1044 = vmatpush1.msra.mxu0 %v319
        %1045 = vmatprep.subr.mxu0 %v326
        %1046 = vmatpush1.msra.mxu0 %v325
        %1047 = vmatprep.subr.mxu0 %v332
        %1048 = vmatpush1.msra.mxu0 %v331
        %1049 = vmatprep.subr.mxu0 %v338
        %1050 = vmatpush1.msra.mxu0 %v337
        %1051 = vmatprep.subr.mxu0 %v344
        %1052 = vmatpush1.msra.mxu0 %v343
        %1053 = vmatprep.subr.mxu0 %v350
        %1054 = vmatpush1.msra.mxu0 %v349
        %1055 = vmatprep.subr.mxu0 %v356
        %1056 = vmatpush1.msra.mxu0 %v355
        %1057 = vmatprep.subr.mxu0 %v362
        %1058 = vmatpush1.msra.mxu0 %v361
        %1059 = vmatprep.subr.mxu0 %v368
        %1060 = vmatpush1.msra.mxu0 %v367
        %1061 = vmatprep.subr.mxu0 %v374
        %1062 = vmatpush1.msra.mxu0 %v373
        %1063 = vmatprep.subr.mxu0 %v380
        %1064 = vmatpush1.msra.mxu0 %v379
        %1065 = vmatprep.subr.mxu0 %v386
        %1066 = vmatpush1.msra.mxu0 %v385
        %1067 = vmatprep.subr.mxu0 %v392
        %1068 = vmatpush1.msra.mxu0 %v391
        %1069 = vmatprep.subr.mxu0 %v398
        %1070 = vmatpush1.msra.mxu0 %v397
        %1071 = vmatprep.subr.mxu0 %v404
        %1072 = vmatpush1.msra.mxu0 %v403
        %1073 = vmatprep.subr.mxu0 %v410
        %1074 = vmatpush1.msra.mxu0 %v409
        %1075 = vmatprep.subr.mxu0 %v416
        %1076 = vmatpush1.msra.mxu0 %v415
        %1077 = vmatprep.subr.mxu0 %v422
        %1078 = vmatpush1.msra.mxu0 %v421
        %1079 = vmatprep.subr.mxu0 %v428
        %1080 = vmatpush1.msra.mxu0 %v427
        %1081 = vmatprep.subr.mxu0 %v434
        %1082 = vmatpush1.msra.mxu0 %v433
        %1083 = vmatprep.subr.mxu0 %v440
        %1084 = vmatpush1.msra.mxu0 %v439
        %1085 = vmatprep.mubr.f32.mxu0 %v222
        %1086 = vmatmul.mubr.f32.gmra.mrb[0].mxu0 %v221
        %v1087 = vpop.f32.mrb[0].mxu0
        %v1088 = vadd.f32 0.0, %v1087
        %v1089 = vpop.f32.mrb[0].mxu0
        %v1090 = vadd.f32 0.0, %v1089
        %1091 = vmatprep.mubr.f32.mxu0 %v230
        %1092 = vmatmul.mubr.f32.gmra.mrb[0].mxu0 %v229
        %v1093 = vpop.f32.mrb[0].mxu0
        %v1094 = vadd.f32 0.0, %v1093
        %v1095 = vpop.f32.mrb[0].mxu0
        %v1096 = vadd.f32 0.0, %v1095
        %1097 = vmatprep.mubr.f32.mxu0 %v238
        %1098 = vmatmul.mubr.f32.gmra.mrb[0].mxu0 %v237
        %v1099 = vpop.f32.mrb[0].mxu0
        %v1100 = vadd.f32 0.0, %v1099
        %v1101 = vpop.f32.mrb[0].mxu0
        %v1102 = vadd.f32 0.0, %v1101
        %1103 = vmatprep.mubr.f32.mxu0 %v246
        %1104 = vmatmul.mubr.f32.gmra.mrb[0].mxu0 %v245
        %v1105 = vpop.f32.mrb[0].mxu0
        %v1106 = vadd.f32 0.0, %v1105
        %v1107 = vpop.f32.mrb[0].mxu0
        %v1108 = vadd.f32 0.0, %v1107
        %1109 = vdwg.mxu0
        %1110 = vmatprep.subr.mxu0 %v446
        %1111 = vmatpush1.msra.mxu0 %v445
        %1112 = vmatprep.subr.mxu0 %v452
        %1113 = vmatpush1.msra.mxu0 %v451
        %1114 = vmatprep.subr.mxu0 %v458
        %1115 = vmatpush1.msra.mxu0 %v457
        %1116 = vmatprep.subr.mxu0 %v464
        %1117 = vmatpush1.msra.mxu0 %v463
        %1118 = vmatprep.subr.mxu0 %v470
        %1119 = vmatpush1.msra.mxu0 %v469
        %1120 = vmatprep.subr.mxu0 %v476
        %1121 = vmatpush1.msra.mxu0 %v475
        %1122 = vmatprep.subr.mxu0 %v482
        %1123 = vmatpush1.msra.mxu0 %v481
        %1124 = vmatprep.subr.mxu0 %v488
        %1125 = vmatpush1.msra.mxu0 %v487
        %1126 = vmatprep.subr.mxu0 %v494
        %1127 = vmatpush1.msra.mxu0 %v493
        %1128 = vmatprep.subr.mxu0 %v500
        %1129 = vmatpush1.msra.mxu0 %v499
        %1130 = vmatprep.subr.mxu0 %v506
        %1131 = vmatpush1.msra.mxu0 %v505
        %1132 = vmatprep.subr.mxu0 %v512
        %1133 = vmatpush1.msra.mxu0 %v511
        %1134 = vmatprep.subr.mxu0 %v518
        %1135 = vmatpush1.msra.mxu0 %v517
        %1136 = vmatprep.subr.mxu0 %v524
        %1137 = vmatpush1.msra.mxu0 %v523
        %1138 = vmatprep.subr.mxu0 %v530
        %1139 = vmatpush1.msra.mxu0 %v529
        %1140 = vmatprep.subr.mxu0 %v536
        %1141 = vmatpush1.msra.mxu0 %v535
        %1142 = vmatprep.subr.mxu0 %v542
        %1143 = vmatpush1.msra.mxu0 %v541
        %1144 = vmatprep.subr.mxu0 %v548
        %1145 = vmatpush1.msra.mxu0 %v547
        %1146 = vmatprep.subr.mxu0 %v554
        %1147 = vmatpush1.msra.mxu0 %v553
        %1148 = vmatprep.subr.mxu0 %v560
        %1149 = vmatpush1.msra.mxu0 %v559
        %1150 = vmatprep.subr.mxu0 %v566
        %1151 = vmatpush1.msra.mxu0 %v565
        %1152 = vmatprep.subr.mxu0 %v572
        %1153 = vmatpush1.msra.mxu0 %v571
        %1154 = vmatprep.subr.mxu0 %v578
        %1155 = vmatpush1.msra.mxu0 %v577
        %1156 = vmatprep.subr.mxu0 %v584
        %1157 = vmatpush1.msra.mxu0 %v583
        %1158 = vmatprep.subr.mxu0 %v590
        %1159 = vmatpush1.msra.mxu0 %v589
        %1160 = vmatprep.subr.mxu0 %v596
        %1161 = vmatpush1.msra.mxu0 %v595
        %1162 = vmatprep.subr.mxu0 %v602
        %1163 = vmatpush1.msra.mxu0 %v601
        %1164 = vmatprep.subr.mxu0 %v608
        %1165 = vmatpush1.msra.mxu0 %v607
        %1166 = vmatprep.subr.mxu0 %v614
        %1167 = vmatpush1.msra.mxu0 %v613
        %1168 = vmatprep.subr.mxu0 %v620
        %1169 = vmatpush1.msra.mxu0 %v619
        %1170 = vmatprep.subr.mxu0 %v626
        %1171 = vmatpush1.msra.mxu0 %v625
        %1172 = vmatprep.subr.mxu0 %v632
        %1173 = vmatpush1.msra.mxu0 %v631
        %1174 = vmatprep.mubr.f32.mxu0 %v224
        %1175 = vmatmul.mubr.f32.gmra.mrb[0].mxu0 %v223
        %v1176 = vpop.f32.mrb[0].mxu0
        %v1177 = vadd.f32 %v1088, %v1176
        %v1178 = vpop.f32.mrb[0].mxu0
        %v1179 = vadd.f32 %v1090, %v1178
        %1180 = vmatprep.mubr.f32.mxu0 %v232
        %1181 = vmatmul.mubr.f32.gmra.mrb[0].mxu0 %v231
        %v1182 = vpop.f32.mrb[0].mxu0
        %v1183 = vadd.f32 %v1094, %v1182
        %v1184 = vpop.f32.mrb[0].mxu0
        %v1185 = vadd.f32 %v1096, %v1184
        %1186 = vmatprep.mubr.f32.mxu0 %v240
        %1187 = vmatmul.mubr.f32.gmra.mrb[0].mxu0 %v239
        %v1188 = vpop.f32.mrb[0].mxu0
        %v1189 = vadd.f32 %v1100, %v1188
        %v1190 = vpop.f32.mrb[0].mxu0
        %v1191 = vadd.f32 %v1102, %v1190
        %1192 = vmatprep.mubr.f32.mxu0 %v248
        %1193 = vmatmul.mubr.f32.gmra.mrb[0].mxu0 %v247
        %v1194 = vpop.f32.mrb[0].mxu0
        %v1195 = vadd.f32 %v1106, %v1194
        %v1196 = vpop.f32.mrb[0].mxu0
        %v1197 = vadd.f32 %v1108, %v1196
        %1198 = vdwg.mxu0
        %1199 = vmatprep.subr.mxu0 %v638
        %1200 = vmatpush1.msra.mxu0 %v637
        %1201 = vmatprep.subr.mxu0 %v644
        %1202 = vmatpush1.msra.mxu0 %v643
        %1203 = vmatprep.subr.mxu0 %v650
        %1204 = vmatpush1.msra.mxu0 %v649
        %1205 = vmatprep.subr.mxu0 %v656
        %1206 = vmatpush1.msra.mxu0 %v655
        %1207 = vmatprep.subr.mxu0 %v662
        %1208 = vmatpush1.msra.mxu0 %v661
        %1209 = vmatprep.subr.mxu0 %v668
        %1210 = vmatpush1.msra.mxu0 %v667
        %1211 = vmatprep.subr.mxu0 %v674
        %1212 = vmatpush1.msra.mxu0 %v673
        %1213 = vmatprep.subr.mxu0 %v680
        %1214 = vmatpush1.msra.mxu0 %v679
        %1215 = vmatprep.subr.mxu0 %v686
        %1216 = vmatpush1.msra.mxu0 %v685
        %1217 = vmatprep.subr.mxu0 %v692
        %1218 = vmatpush1.msra.mxu0 %v691
        %1219 = vmatprep.subr.mxu0 %v698
        %1220 = vmatpush1.msra.mxu0 %v697
        %1221 = vmatprep.subr.mxu0 %v704
        %1222 = vmatpush1.msra.mxu0 %v703
        %1223 = vmatprep.subr.mxu0 %v710
        %1224 = vmatpush1.msra.mxu0 %v709
        %1225 = vmatprep.subr.mxu0 %v716
        %1226 = vmatpush1.msra.mxu0 %v715
        %1227 = vmatprep.subr.mxu0 %v722
        %1228 = vmatpush1.msra.mxu0 %v721
        %1229 = vmatprep.subr.mxu0 %v728
        %1230 = vmatpush1.msra.mxu0 %v727
        %1231 = vmatprep.subr.mxu0 %v734
        %1232 = vmatpush1.msra.mxu0 %v733
        %1233 = vmatprep.subr.mxu0 %v740
        %1234 = vmatpush1.msra.mxu0 %v739
        %1235 = vmatprep.subr.mxu0 %v746
        %1236 = vmatpush1.msra.mxu0 %v745
        %1237 = vmatprep.subr.mxu0 %v752
        %1238 = vmatpush1.msra.mxu0 %v751
        %1239 = vmatprep.subr.mxu0 %v758
        %1240 = vmatpush1.msra.mxu0 %v757
        %1241 = vmatprep.subr.mxu0 %v764
        %1242 = vmatpush1.msra.mxu0 %v763
        %1243 = vmatprep.subr.mxu0 %v770
        %1244 = vmatpush1.msra.mxu0 %v769
        %1245 = vmatprep.subr.mxu0 %v776
        %1246 = vmatpush1.msra.mxu0 %v775
        %1247 = vmatprep.subr.mxu0 %v782
        %1248 = vmatpush1.msra.mxu0 %v781
        %1249 = vmatprep.subr.mxu0 %v788
        %1250 = vmatpush1.msra.mxu0 %v787
        %1251 = vmatprep.subr.mxu0 %v794
        %1252 = vmatpush1.msra.mxu0 %v793
        %1253 = vmatprep.subr.mxu0 %v800
        %1254 = vmatpush1.msra.mxu0 %v799
        %1255 = vmatprep.subr.mxu0 %v806
        %1256 = vmatpush1.msra.mxu0 %v805
        %1257 = vmatprep.subr.mxu0 %v812
        %1258 = vmatpush1.msra.mxu0 %v811
        %1259 = vmatprep.subr.mxu0 %v818
        %1260 = vmatpush1.msra.mxu0 %v817
        %1261 = vmatprep.subr.mxu0 %v824
        %1262 = vmatpush1.msra.mxu0 %v823
        %1263 = vmatprep.mubr.f32.mxu0 %v226
        %1264 = vmatmul.mubr.f32.gmra.mrb[0].mxu0 %v225
        %v1265 = vpop.f32.mrb[0].mxu0
        %v1266 = vadd.f32 %v1177, %v1265
        %v1267 = vpop.f32.mrb[0].mxu0
        %v1268 = vadd.f32 %v1179, %v1267
        %1269 = vmatprep.mubr.f32.mxu0 %v234
        %1270 = vmatmul.mubr.f32.gmra.mrb[0].mxu0 %v233
        %v1271 = vpop.f32.mrb[0].mxu0
        %v1272 = vadd.f32 %v1183, %v1271
        %v1273 = vpop.f32.mrb[0].mxu0
        %v1274 = vadd.f32 %v1185, %v1273
        %1275 = vmatprep.mubr.f32.mxu0 %v242
        %1276 = vmatmul.mubr.f32.gmra.mrb[0].mxu0 %v241
        %v1277 = vpop.f32.mrb[0].mxu0
        %v1278 = vadd.f32 %v1189, %v1277
        %v1279 = vpop.f32.mrb[0].mxu0
        %v1280 = vadd.f32 %v1191, %v1279
        %1281 = vmatprep.mubr.f32.mxu0 %v250
        %1282 = vmatmul.mubr.f32.gmra.mrb[0].mxu0 %v249
        %v1283 = vpop.f32.mrb[0].mxu0
        %v1284 = vadd.f32 %v1195, %v1283
        %v1285 = vpop.f32.mrb[0].mxu0
        %v1286 = vadd.f32 %v1197, %v1285
        %1287 = vdwg.mxu0
        %1288 = vmatprep.subr.mxu0 %v830
        %1289 = vmatpush1.msra.mxu0 %v829
        %1290 = vmatprep.subr.mxu0 %v836
        %1291 = vmatpush1.msra.mxu0 %v835
        %1292 = vmatprep.subr.mxu0 %v842
        %1293 = vmatpush1.msra.mxu0 %v841
        %1294 = vmatprep.subr.mxu0 %v848
        %1295 = vmatpush1.msra.mxu0 %v847
        %1296 = vmatprep.subr.mxu0 %v854
        %1297 = vmatpush1.msra.mxu0 %v853
        %1298 = vmatprep.subr.mxu0 %v860
        %1299 = vmatpush1.msra.mxu0 %v859
        %1300 = vmatprep.subr.mxu0 %v866
        %1301 = vmatpush1.msra.mxu0 %v865
        %1302 = vmatprep.subr.mxu0 %v872
        %1303 = vmatpush1.msra.mxu0 %v871
        %1304 = vmatprep.subr.mxu0 %v878
        %1305 = vmatpush1.msra.mxu0 %v877
        %1306 = vmatprep.subr.mxu0 %v884
        %1307 = vmatpush1.msra.mxu0 %v883
        %1308 = vmatprep.subr.mxu0 %v890
        %1309 = vmatpush1.msra.mxu0 %v889
        %1310 = vmatprep.subr.mxu0 %v896
        %1311 = vmatpush1.msra.mxu0 %v895
        %1312 = vmatprep.subr.mxu0 %v902
        %1313 = vmatpush1.msra.mxu0 %v901
        %1314 = vmatprep.subr.mxu0 %v908
        %1315 = vmatpush1.msra.mxu0 %v907
        %1316 = vmatprep.subr.mxu0 %v914
        %1317 = vmatpush1.msra.mxu0 %v913
        %1318 = vmatprep.subr.mxu0 %v920
        %1319 = vmatpush1.msra.mxu0 %v919
        %1320 = vmatprep.subr.mxu0 %v926
        %1321 = vmatpush1.msra.mxu0 %v925
        %1322 = vmatprep.subr.mxu0 %v932
        %1323 = vmatpush1.msra.mxu0 %v931
        %1324 = vmatprep.subr.mxu0 %v938
        %1325 = vmatpush1.msra.mxu0 %v937
        %1326 = vmatprep.subr.mxu0 %v944
        %1327 = vmatpush1.msra.mxu0 %v943
        %1328 = vmatprep.subr.mxu0 %v950
        %1329 = vmatpush1.msra.mxu0 %v949
        %1330 = vmatprep.subr.mxu0 %v956
        %1331 = vmatpush1.msra.mxu0 %v955
        %1332 = vmatprep.subr.mxu0 %v962
        %1333 = vmatpush1.msra.mxu0 %v961
        %1334 = vmatprep.subr.mxu0 %v968
        %1335 = vmatpush1.msra.mxu0 %v967
        %1336 = vmatprep.subr.mxu0 %v974
        %1337 = vmatpush1.msra.mxu0 %v973
        %1338 = vmatprep.subr.mxu0 %v980
        %1339 = vmatpush1.msra.mxu0 %v979
        %1340 = vmatprep.subr.mxu0 %v986
        %1341 = vmatpush1.msra.mxu0 %v985
        %1342 = vmatprep.subr.mxu0 %v992
        %1343 = vmatpush1.msra.mxu0 %v991
        %1344 = vmatprep.subr.mxu0 %v998
        %1345 = vmatpush1.msra.mxu0 %v997
        %1346 = vmatprep.subr.mxu0 %v1004
        %1347 = vmatpush1.msra.mxu0 %v1003
        %1348 = vmatprep.subr.mxu0 %v1010
        %1349 = vmatpush1.msra.mxu0 %v1009
        %1350 = vmatprep.subr.mxu0 %v1016
        %1351 = vmatpush1.msra.mxu0 %v1015
        %1352 = vmatprep.mubr.f32.mxu0 %v228
        %1353 = vmatmul.mubr.f32.gmra.mrb[0].mxu0 %v227
        %v1354 = vpop.f32.mrb[0].mxu0
        %v1355 = vadd.f32 %v1266, %v1354
        %v1356 = vpop.f32.mrb[0].mxu0
        %v1357 = vadd.f32 %v1268, %v1356
        %1358 = vmatprep.mubr.f32.mxu0 %v236
        %1359 = vmatmul.mubr.f32.gmra.mrb[0].mxu0 %v235
        %v1360 = vpop.f32.mrb[0].mxu0
        %v1361 = vadd.f32 %v1272, %v1360
        %v1362 = vpop.f32.mrb[0].mxu0
        %v1363 = vadd.f32 %v1274, %v1362
        %1364 = vmatprep.mubr.f32.mxu0 %v244
        %1365 = vmatmul.mubr.f32.gmra.mrb[0].mxu0 %v243
        %v1366 = vpop.f32.mrb[0].mxu0
        %v1367 = vadd.f32 %v1278, %v1366
        %v1368 = vpop.f32.mrb[0].mxu0
        %v1369 = vadd.f32 %v1280, %v1368
        %1370 = vmatprep.mubr.f32.mxu0 %v252
        %1371 = vmatmul.mubr.f32.gmra.mrb[0].mxu0 %v251
        %v1372 = vpop.f32.mrb[0].mxu0
        %v1373 = vadd.f32 %v1284, %v1372
        %v1374 = vpop.f32.mrb[0].mxu0
        %v1375 = vadd.f32 %v1286, %v1374
        %1376 = vdwg.mxu0
        %1377 = vmatprep.subr.mxu0 %v256
        %1378 = vmatpush1.msra.mxu0 %v255
        %1379 = vmatprep.subr.mxu0 %v262
        %1380 = vmatpush1.msra.mxu0 %v261
        %1381 = vmatprep.subr.mxu0 %v268
        %1382 = vmatpush1.msra.mxu0 %v267
        %1383 = vmatprep.subr.mxu0 %v274
        %1384 = vmatpush1.msra.mxu0 %v273
        %1385 = vmatprep.subr.mxu0 %v280
        %1386 = vmatpush1.msra.mxu0 %v279
        %1387 = vmatprep.subr.mxu0 %v286
        %1388 = vmatpush1.msra.mxu0 %v285
        %1389 = vmatprep.subr.mxu0 %v292
        %1390 = vmatpush1.msra.mxu0 %v291
        %1391 = vmatprep.subr.mxu0 %v298
        %1392 = vmatpush1.msra.mxu0 %v297
        %1393 = vmatprep.subr.mxu0 %v304
        %1394 = vmatpush1.msra.mxu0 %v303
        %1395 = vmatprep.subr.mxu0 %v310
        %1396 = vmatpush1.msra.mxu0 %v309
        %1397 = vmatprep.subr.mxu0 %v316
        %1398 = vmatpush1.msra.mxu0 %v315
        %1399 = vmatprep.subr.mxu0 %v322
        %1400 = vmatpush1.msra.mxu0 %v321
        %1401 = vmatprep.subr.mxu0 %v328
        %1402 = vmatpush1.msra.mxu0 %v327
        %1403 = vmatprep.subr.mxu0 %v334
        %1404 = vmatpush1.msra.mxu0 %v333
        %1405 = vmatprep.subr.mxu0 %v340
        %1406 = vmatpush1.msra.mxu0 %v339
        %1407 = vmatprep.subr.mxu0 %v346
        %1408 = vmatpush1.msra.mxu0 %v345
        %1409 = vmatprep.subr.mxu0 %v352
        %1410 = vmatpush1.msra.mxu0 %v351
        %1411 = vmatprep.subr.mxu0 %v358
        %1412 = vmatpush1.msra.mxu0 %v357
        %1413 = vmatprep.subr.mxu0 %v364
        %1414 = vmatpush1.msra.mxu0 %v363
        %1415 = vmatprep.subr.mxu0 %v370
        %1416 = vmatpush1.msra.mxu0 %v369
        %1417 = vmatprep.subr.mxu0 %v376
        %1418 = vmatpush1.msra.mxu0 %v375
        %1419 = vmatprep.subr.mxu0 %v382
        %1420 = vmatpush1.msra.mxu0 %v381
        %1421 = vmatprep.subr.mxu0 %v388
        %1422 = vmatpush1.msra.mxu0 %v387
        %1423 = vmatprep.subr.mxu0 %v394
        %1424 = vmatpush1.msra.mxu0 %v393
        %1425 = vmatprep.subr.mxu0 %v400
        %1426 = vmatpush1.msra.mxu0 %v399
        %1427 = vmatprep.subr.mxu0 %v406
        %1428 = vmatpush1.msra.mxu0 %v405
        %1429 = vmatprep.subr.mxu0 %v412
        %1430 = vmatpush1.msra.mxu0 %v411
        %1431 = vmatprep.subr.mxu0 %v418
        %1432 = vmatpush1.msra.mxu0 %v417
        %1433 = vmatprep.subr.mxu0 %v424
        %1434 = vmatpush1.msra.mxu0 %v423
        %1435 = vmatprep.subr.mxu0 %v430
        %1436 = vmatpush1.msra.mxu0 %v429
        %1437 = vmatprep.subr.mxu0 %v436
        %1438 = vmatpush1.msra.mxu0 %v435
        %1439 = vmatprep.subr.mxu0 %v442
        %1440 = vmatpush1.msra.mxu0 %v441
        %1441 = vmatprep.mubr.f32.mxu0 %v222
        %1442 = vmatmul.mubr.f32.gmra.mrb[0].mxu0 %v221
        %v1443 = vpop.f32.mrb[0].mxu0
        %v1444 = vadd.f32 0.0, %v1443
        %v1445 = vpop.f32.mrb[0].mxu0
        %v1446 = vadd.f32 0.0, %v1445
        %1447 = vmatprep.mubr.f32.mxu0 %v230
        %1448 = vmatmul.mubr.f32.gmra.mrb[0].mxu0 %v229
        %v1449 = vpop.f32.mrb[0].mxu0
        %v1450 = vadd.f32 0.0, %v1449
        %v1451 = vpop.f32.mrb[0].mxu0
        %v1452 = vadd.f32 0.0, %v1451
        %1453 = vmatprep.mubr.f32.mxu0 %v238
        %1454 = vmatmul.mubr.f32.gmra.mrb[0].mxu0 %v237
        %v1455 = vpop.f32.mrb[0].mxu0
        %v1456 = vadd.f32 0.0, %v1455
        %v1457 = vpop.f32.mrb[0].mxu0
        %v1458 = vadd.f32 0.0, %v1457
        %1459 = vmatprep.mubr.f32.mxu0 %v246
        %1460 = vmatmul.mubr.f32.gmra.mrb[0].mxu0 %v245
        %v1461 = vpop.f32.mrb[0].mxu0
        %v1462 = vadd.f32 0.0, %v1461
        %v1463 = vpop.f32.mrb[0].mxu0
        %v1464 = vadd.f32 0.0, %v1463
        %1465 = vdwg.mxu0
        %1466 = vmatprep.subr.mxu0 %v448
        %1467 = vmatpush1.msra.mxu0 %v447
        %1468 = vmatprep.subr.mxu0 %v454
        %1469 = vmatpush1.msra.mxu0 %v453
        %1470 = vmatprep.subr.mxu0 %v460
        %1471 = vmatpush1.msra.mxu0 %v459
        %1472 = vmatprep.subr.mxu0 %v466
        %1473 = vmatpush1.msra.mxu0 %v465
        %1474 = vmatprep.subr.mxu0 %v472
        %1475 = vmatpush1.msra.mxu0 %v471
        %1476 = vmatprep.subr.mxu0 %v478
        %1477 = vmatpush1.msra.mxu0 %v477
        %1478 = vmatprep.subr.mxu0 %v484
        %1479 = vmatpush1.msra.mxu0 %v483
        %1480 = vmatprep.subr.mxu0 %v490
        %1481 = vmatpush1.msra.mxu0 %v489
        %1482 = vmatprep.subr.mxu0 %v496
        %1483 = vmatpush1.msra.mxu0 %v495
        %1484 = vmatprep.subr.mxu0 %v502
        %1485 = vmatpush1.msra.mxu0 %v501
        %1486 = vmatprep.subr.mxu0 %v508
        %1487 = vmatpush1.msra.mxu0 %v507
        %1488 = vmatprep.subr.mxu0 %v514
        %1489 = vmatpush1.msra.mxu0 %v513
        %1490 = vmatprep.subr.mxu0 %v520
        %1491 = vmatpush1.msra.mxu0 %v519
        %1492 = vmatprep.subr.mxu0 %v526
        %1493 = vmatpush1.msra.mxu0 %v525
        %1494 = vmatprep.subr.mxu0 %v532
        %1495 = vmatpush1.msra.mxu0 %v531
        %1496 = vmatprep.subr.mxu0 %v538
        %1497 = vmatpush1.msra.mxu0 %v537
        %1498 = vmatprep.subr.mxu0 %v544
        %1499 = vmatpush1.msra.mxu0 %v543
        %1500 = vmatprep.subr.mxu0 %v550
        %1501 = vmatpush1.msra.mxu0 %v549
        %1502 = vmatprep.subr.mxu0 %v556
        %1503 = vmatpush1.msra.mxu0 %v555
        %1504 = vmatprep.subr.mxu0 %v562
        %1505 = vmatpush1.msra.mxu0 %v561
        %1506 = vmatprep.subr.mxu0 %v568
        %1507 = vmatpush1.msra.mxu0 %v567
        %1508 = vmatprep.subr.mxu0 %v574
        %1509 = vmatpush1.msra.mxu0 %v573
        %1510 = vmatprep.subr.mxu0 %v580
        %1511 = vmatpush1.msra.mxu0 %v579
        %1512 = vmatprep.subr.mxu0 %v586
        %1513 = vmatpush1.msra.mxu0 %v585
        %1514 = vmatprep.subr.mxu0 %v592
        %1515 = vmatpush1.msra.mxu0 %v591
        %1516 = vmatprep.subr.mxu0 %v598
        %1517 = vmatpush1.msra.mxu0 %v597
        %1518 = vmatprep.subr.mxu0 %v604
        %1519 = vmatpush1.msra.mxu0 %v603
        %1520 = vmatprep.subr.mxu0 %v610
        %1521 = vmatpush1.msra.mxu0 %v609
        %1522 = vmatprep.subr.mxu0 %v616
        %1523 = vmatpush1.msra.mxu0 %v615
        %1524 = vmatprep.subr.mxu0 %v622
        %1525 = vmatpush1.msra.mxu0 %v621
        %1526 = vmatprep.subr.mxu0 %v628
        %1527 = vmatpush1.msra.mxu0 %v627
        %1528 = vmatprep.subr.mxu0 %v634
        %1529 = vmatpush1.msra.mxu0 %v633
        %1530 = vmatprep.mubr.f32.mxu0 %v224
        %1531 = vmatmul.mubr.f32.gmra.mrb[0].mxu0 %v223
        %v1532 = vpop.f32.mrb[0].mxu0
        %v1533 = vadd.f32 %v1444, %v1532
        %v1534 = vpop.f32.mrb[0].mxu0
        %v1535 = vadd.f32 %v1446, %v1534
        %1536 = vmatprep.mubr.f32.mxu0 %v232
        %1537 = vmatmul.mubr.f32.gmra.mrb[0].mxu0 %v231
        %v1538 = vpop.f32.mrb[0].mxu0
        %v1539 = vadd.f32 %v1450, %v1538
        %v1540 = vpop.f32.mrb[0].mxu0
        %v1541 = vadd.f32 %v1452, %v1540
        %1542 = vmatprep.mubr.f32.mxu0 %v240
        %1543 = vmatmul.mubr.f32.gmra.mrb[0].mxu0 %v239
        %v1544 = vpop.f32.mrb[0].mxu0
        %v1545 = vadd.f32 %v1456, %v1544
        %v1546 = vpop.f32.mrb[0].mxu0
        %v1547 = vadd.f32 %v1458, %v1546
        %1548 = vmatprep.mubr.f32.mxu0 %v248
        %1549 = vmatmul.mubr.f32.gmra.mrb[0].mxu0 %v247
        %v1550 = vpop.f32.mrb[0].mxu0
        %v1551 = vadd.f32 %v1462, %v1550
        %v1552 = vpop.f32.mrb[0].mxu0
        %v1553 = vadd.f32 %v1464, %v1552
        %1554 = vdwg.mxu0
        %1555 = vmatprep.subr.mxu0 %v640
        %1556 = vmatpush1.msra.mxu0 %v639
        %1557 = vmatprep.subr.mxu0 %v646
        %1558 = vmatpush1.msra.mxu0 %v645
        %1559 = vmatprep.subr.mxu0 %v652
        %1560 = vmatpush1.msra.mxu0 %v651
        %1561 = vmatprep.subr.mxu0 %v658
        %1562 = vmatpush1.msra.mxu0 %v657
        %1563 = vmatprep.subr.mxu0 %v664
        %1564 = vmatpush1.msra.mxu0 %v663
        %1565 = vmatprep.subr.mxu0 %v670
        %1566 = vmatpush1.msra.mxu0 %v669
        %1567 = vmatprep.subr.mxu0 %v676
        %1568 = vmatpush1.msra.mxu0 %v675
        %1569 = vmatprep.subr.mxu0 %v682
        %1570 = vmatpush1.msra.mxu0 %v681
        %1571 = vmatprep.subr.mxu0 %v688
        %1572 = vmatpush1.msra.mxu0 %v687
        %1573 = vmatprep.subr.mxu0 %v694
        %1574 = vmatpush1.msra.mxu0 %v693
        %1575 = vmatprep.subr.mxu0 %v700
        %1576 = vmatpush1.msra.mxu0 %v699
        %1577 = vmatprep.subr.mxu0 %v706
        %1578 = vmatpush1.msra.mxu0 %v705
        %1579 = vmatprep.subr.mxu0 %v712
        %1580 = vmatpush1.msra.mxu0 %v711
        %1581 = vmatprep.subr.mxu0 %v718
        %1582 = vmatpush1.msra.mxu0 %v717
        %1583 = vmatprep.subr.mxu0 %v724
        %1584 = vmatpush1.msra.mxu0 %v723
        %1585 = vmatprep.subr.mxu0 %v730
        %1586 = vmatpush1.msra.mxu0 %v729
        %1587 = vmatprep.subr.mxu0 %v736
        %1588 = vmatpush1.msra.mxu0 %v735
        %1589 = vmatprep.subr.mxu0 %v742
        %1590 = vmatpush1.msra.mxu0 %v741
        %1591 = vmatprep.subr.mxu0 %v748
        %1592 = vmatpush1.msra.mxu0 %v747
        %1593 = vmatprep.subr.mxu0 %v754
        %1594 = vmatpush1.msra.mxu0 %v753
        %1595 = vmatprep.subr.mxu0 %v760
        %1596 = vmatpush1.msra.mxu0 %v759
        %1597 = vmatprep.subr.mxu0 %v766
        %1598 = vmatpush1.msra.mxu0 %v765
        %1599 = vmatprep.subr.mxu0 %v772
        %1600 = vmatpush1.msra.mxu0 %v771
        %1601 = vmatprep.subr.mxu0 %v778
        %1602 = vmatpush1.msra.mxu0 %v777
        %1603 = vmatprep.subr.mxu0 %v784
        %1604 = vmatpush1.msra.mxu0 %v783
        %1605 = vmatprep.subr.mxu0 %v790
        %1606 = vmatpush1.msra.mxu0 %v789
        %1607 = vmatprep.subr.mxu0 %v796
        %1608 = vmatpush1.msra.mxu0 %v795
        %1609 = vmatprep.subr.mxu0 %v802
        %1610 = vmatpush1.msra.mxu0 %v801
        %1611 = vmatprep.subr.mxu0 %v808
        %1612 = vmatpush1.msra.mxu0 %v807
        %1613 = vmatprep.subr.mxu0 %v814
        %1614 = vmatpush1.msra.mxu0 %v813
        %1615 = vmatprep.subr.mxu0 %v820
        %1616 = vmatpush1.msra.mxu0 %v819
        %1617 = vmatprep.subr.mxu0 %v826
        %1618 = vmatpush1.msra.mxu0 %v825
        %1619 = vmatprep.mubr.f32.mxu0 %v226
        %1620 = vmatmul.mubr.f32.gmra.mrb[0].mxu0 %v225
        %v1621 = vpop.f32.mrb[0].mxu0
        %v1622 = vadd.f32 %v1533, %v1621
        %v1623 = vpop.f32.mrb[0].mxu0
        %v1624 = vadd.f32 %v1535, %v1623
        %1625 = vmatprep.mubr.f32.mxu0 %v234
        %1626 = vmatmul.mubr.f32.gmra.mrb[0].mxu0 %v233
        %v1627 = vpop.f32.mrb[0].mxu0
        %v1628 = vadd.f32 %v1539, %v1627
        %v1629 = vpop.f32.mrb[0].mxu0
        %v1630 = vadd.f32 %v1541, %v1629
        %1631 = vmatprep.mubr.f32.mxu0 %v242
        %1632 = vmatmul.mubr.f32.gmra.mrb[0].mxu0 %v241
        %v1633 = vpop.f32.mrb[0].mxu0
        %v1634 = vadd.f32 %v1545, %v1633
        %v1635 = vpop.f32.mrb[0].mxu0
        %v1636 = vadd.f32 %v1547, %v1635
        %1637 = vmatprep.mubr.f32.mxu0 %v250
        %1638 = vmatmul.mubr.f32.gmra.mrb[0].mxu0 %v249
        %v1639 = vpop.f32.mrb[0].mxu0
        %v1640 = vadd.f32 %v1551, %v1639
        %v1641 = vpop.f32.mrb[0].mxu0
        %v1642 = vadd.f32 %v1553, %v1641
        %1643 = vdwg.mxu0
        %1644 = vmatprep.subr.mxu0 %v832
        %1645 = vmatpush1.msra.mxu0 %v831
        %1646 = vmatprep.subr.mxu0 %v838
        %1647 = vmatpush1.msra.mxu0 %v837
        %1648 = vmatprep.subr.mxu0 %v844
        %1649 = vmatpush1.msra.mxu0 %v843
        %1650 = vmatprep.subr.mxu0 %v850
        %1651 = vmatpush1.msra.mxu0 %v849
        %1652 = vmatprep.subr.mxu0 %v856
        %1653 = vmatpush1.msra.mxu0 %v855
        %1654 = vmatprep.subr.mxu0 %v862
        %1655 = vmatpush1.msra.mxu0 %v861
        %1656 = vmatprep.subr.mxu0 %v868
        %1657 = vmatpush1.msra.mxu0 %v867
        %1658 = vmatprep.subr.mxu0 %v874
        %1659 = vmatpush1.msra.mxu0 %v873
        %1660 = vmatprep.subr.mxu0 %v880
        %1661 = vmatpush1.msra.mxu0 %v879
        %1662 = vmatprep.subr.mxu0 %v886
        %1663 = vmatpush1.msra.mxu0 %v885
        %1664 = vmatprep.subr.mxu0 %v892
        %1665 = vmatpush1.msra.mxu0 %v891
        %1666 = vmatprep.subr.mxu0 %v898
        %1667 = vmatpush1.msra.mxu0 %v897
        %1668 = vmatprep.subr.mxu0 %v904
        %1669 = vmatpush1.msra.mxu0 %v903
        %1670 = vmatprep.subr.mxu0 %v910
        %1671 = vmatpush1.msra.mxu0 %v909
        %1672 = vmatprep.subr.mxu0 %v916
        %1673 = vmatpush1.msra.mxu0 %v915
        %1674 = vmatprep.subr.mxu0 %v922
        %1675 = vmatpush1.msra.mxu0 %v921
        %1676 = vmatprep.subr.mxu0 %v928
        %1677 = vmatpush1.msra.mxu0 %v927
        %1678 = vmatprep.subr.mxu0 %v934
        %1679 = vmatpush1.msra.mxu0 %v933
        %1680 = vmatprep.subr.mxu0 %v940
        %1681 = vmatpush1.msra.mxu0 %v939
        %1682 = vmatprep.subr.mxu0 %v946
        %1683 = vmatpush1.msra.mxu0 %v945
        %1684 = vmatprep.subr.mxu0 %v952
        %1685 = vmatpush1.msra.mxu0 %v951
        %1686 = vmatprep.subr.mxu0 %v958
        %1687 = vmatpush1.msra.mxu0 %v957
        %1688 = vmatprep.subr.mxu0 %v964
        %1689 = vmatpush1.msra.mxu0 %v963
        %1690 = vmatprep.subr.mxu0 %v970
        %1691 = vmatpush1.msra.mxu0 %v969
        %1692 = vmatprep.subr.mxu0 %v976
        %1693 = vmatpush1.msra.mxu0 %v975
        %1694 = vmatprep.subr.mxu0 %v982
        %1695 = vmatpush1.msra.mxu0 %v981
        %1696 = vmatprep.subr.mxu0 %v988
        %1697 = vmatpush1.msra.mxu0 %v987
        %1698 = vmatprep.subr.mxu0 %v994
        %1699 = vmatpush1.msra.mxu0 %v993
        %1700 = vmatprep.subr.mxu0 %v1000
        %1701 = vmatpush1.msra.mxu0 %v999
        %1702 = vmatprep.subr.mxu0 %v1006
        %1703 = vmatpush1.msra.mxu0 %v1005
        %1704 = vmatprep.subr.mxu0 %v1012
        %1705 = vmatpush1.msra.mxu0 %v1011
        %1706 = vmatprep.subr.mxu0 %v1018
        %1707 = vmatpush1.msra.mxu0 %v1017
        %1708 = vmatprep.mubr.f32.mxu0 %v228
        %1709 = vmatmul.mubr.f32.gmra.mrb[0].mxu0 %v227
        %v1710 = vpop.f32.mrb[0].mxu0
        %v1711 = vadd.f32 %v1622, %v1710
        %v1712 = vpop.f32.mrb[0].mxu0
        %v1713 = vadd.f32 %v1624, %v1712
        %1714 = vmatprep.mubr.f32.mxu0 %v236
        %1715 = vmatmul.mubr.f32.gmra.mrb[0].mxu0 %v235
        %v1716 = vpop.f32.mrb[0].mxu0
        %v1717 = vadd.f32 %v1628, %v1716
        %v1718 = vpop.f32.mrb[0].mxu0
        %v1719 = vadd.f32 %v1630, %v1718
        %1720 = vmatprep.mubr.f32.mxu0 %v244
        %1721 = vmatmul.mubr.f32.gmra.mrb[0].mxu0 %v243
        %v1722 = vpop.f32.mrb[0].mxu0
        %v1723 = vadd.f32 %v1634, %v1722
        %v1724 = vpop.f32.mrb[0].mxu0
        %v1725 = vadd.f32 %v1636, %v1724
        %1726 = vmatprep.mubr.f32.mxu0 %v252
        %1727 = vmatmul.mubr.f32.gmra.mrb[0].mxu0 %v251
        %v1728 = vpop.f32.mrb[0].mxu0
        %v1729 = vadd.f32 %v1640, %v1728
        %v1730 = vpop.f32.mrb[0].mxu0
        %v1731 = vadd.f32 %v1642, %v1730
        %1732 = vdwg.mxu0
        %1733 = vmatprep.subr.mxu0 %v258
        %1734 = vmatpush1.msra.mxu0 %v257
        %1735 = vmatprep.subr.mxu0 %v264
        %1736 = vmatpush1.msra.mxu0 %v263
        %1737 = vmatprep.subr.mxu0 %v270
        %1738 = vmatpush1.msra.mxu0 %v269
        %1739 = vmatprep.subr.mxu0 %v276
        %1740 = vmatpush1.msra.mxu0 %v275
        %1741 = vmatprep.subr.mxu0 %v282
        %1742 = vmatpush1.msra.mxu0 %v281
        %1743 = vmatprep.subr.mxu0 %v288
        %1744 = vmatpush1.msra.mxu0 %v287
        %1745 = vmatprep.subr.mxu0 %v294
        %1746 = vmatpush1.msra.mxu0 %v293
        %1747 = vmatprep.subr.mxu0 %v300
        %1748 = vmatpush1.msra.mxu0 %v299
        %1749 = vmatprep.subr.mxu0 %v306
        %1750 = vmatpush1.msra.mxu0 %v305
        %1751 = vmatprep.subr.mxu0 %v312
        %1752 = vmatpush1.msra.mxu0 %v311
        %1753 = vmatprep.subr.mxu0 %v318
        %1754 = vmatpush1.msra.mxu0 %v317
        %1755 = vmatprep.subr.mxu0 %v324
        %1756 = vmatpush1.msra.mxu0 %v323
        %1757 = vmatprep.subr.mxu0 %v330
        %1758 = vmatpush1.msra.mxu0 %v329
        %1759 = vmatprep.subr.mxu0 %v336
        %1760 = vmatpush1.msra.mxu0 %v335
        %1761 = vmatprep.subr.mxu0 %v342
        %1762 = vmatpush1.msra.mxu0 %v341
        %1763 = vmatprep.subr.mxu0 %v348
        %1764 = vmatpush1.msra.mxu0 %v347
        %1765 = vmatprep.subr.mxu0 %v354
        %1766 = vmatpush1.msra.mxu0 %v353
        %1767 = vmatprep.subr.mxu0 %v360
        %1768 = vmatpush1.msra.mxu0 %v359
        %1769 = vmatprep.subr.mxu0 %v366
        %1770 = vmatpush1.msra.mxu0 %v365
        %1771 = vmatprep.subr.mxu0 %v372
        %1772 = vmatpush1.msra.mxu0 %v371
        %1773 = vmatprep.subr.mxu0 %v378
        %1774 = vmatpush1.msra.mxu0 %v377
        %1775 = vmatprep.subr.mxu0 %v384
        %1776 = vmatpush1.msra.mxu0 %v383
        %1777 = vmatprep.subr.mxu0 %v390
        %1778 = vmatpush1.msra.mxu0 %v389
        %1779 = vmatprep.subr.mxu0 %v396
        %1780 = vmatpush1.msra.mxu0 %v395
        %1781 = vmatprep.subr.mxu0 %v402
        %1782 = vmatpush1.msra.mxu0 %v401
        %1783 = vmatprep.subr.mxu0 %v408
        %1784 = vmatpush1.msra.mxu0 %v407
        %1785 = vmatprep.subr.mxu0 %v414
        %1786 = vmatpush1.msra.mxu0 %v413
        %1787 = vmatprep.subr.mxu0 %v420
        %1788 = vmatpush1.msra.mxu0 %v419
        %1789 = vmatprep.subr.mxu0 %v426
        %1790 = vmatpush1.msra.mxu0 %v425
        %1791 = vmatprep.subr.mxu0 %v432
        %1792 = vmatpush1.msra.mxu0 %v431
        %1793 = vmatprep.subr.mxu0 %v438
        %1794 = vmatpush1.msra.mxu0 %v437
        %1795 = vmatprep.subr.mxu0 %v444
        %1796 = vmatpush1.msra.mxu0 %v443
        %1797 = vmatprep.mubr.f32.mxu0 %v222
        %1798 = vmatmul.mubr.f32.gmra.mrb[0].mxu0 %v221
        %v1799 = vpop.f32.mrb[0].mxu0
        %v1800 = vadd.f32 0.0, %v1799
        %v1801 = vpop.f32.mrb[0].mxu0
        %v1802 = vadd.f32 0.0, %v1801
        %1803 = vmatprep.mubr.f32.mxu0 %v230
        %1804 = vmatmul.mubr.f32.gmra.mrb[0].mxu0 %v229
        %v1805 = vpop.f32.mrb[0].mxu0
        %v1806 = vadd.f32 0.0, %v1805
        %v1807 = vpop.f32.mrb[0].mxu0
        %v1808 = vadd.f32 0.0, %v1807
        %1809 = vmatprep.mubr.f32.mxu0 %v238
        %1810 = vmatmul.mubr.f32.gmra.mrb[0].mxu0 %v237
        %v1811 = vpop.f32.mrb[0].mxu0
        %v1812 = vadd.f32 0.0, %v1811
        %v1813 = vpop.f32.mrb[0].mxu0
        %v1814 = vadd.f32 0.0, %v1813
        %1815 = vmatprep.mubr.f32.mxu0 %v246
        %1816 = vmatmul.mubr.f32.gmra.mrb[0].mxu0 %v245
        %v1817 = vpop.f32.mrb[0].mxu0
        %v1818 = vadd.f32 0.0, %v1817
        %v1819 = vpop.f32.mrb[0].mxu0
        %v1820 = vadd.f32 0.0, %v1819
        %1821 = vdwg.mxu0
        %1822 = vmatprep.subr.mxu0 %v450
        %1823 = vmatpush1.msra.mxu0 %v449
        %1824 = vmatprep.subr.mxu0 %v456
        %1825 = vmatpush1.msra.mxu0 %v455
        %1826 = vmatprep.subr.mxu0 %v462
        %1827 = vmatpush1.msra.mxu0 %v461
        %1828 = vmatprep.subr.mxu0 %v468
        %1829 = vmatpush1.msra.mxu0 %v467
        %1830 = vmatprep.subr.mxu0 %v474
        %1831 = vmatpush1.msra.mxu0 %v473
        %1832 = vmatprep.subr.mxu0 %v480
        %1833 = vmatpush1.msra.mxu0 %v479
        %1834 = vmatprep.subr.mxu0 %v486
        %1835 = vmatpush1.msra.mxu0 %v485
        %1836 = vmatprep.subr.mxu0 %v492
        %1837 = vmatpush1.msra.mxu0 %v491
        %1838 = vmatprep.subr.mxu0 %v498
        %1839 = vmatpush1.msra.mxu0 %v497
        %1840 = vmatprep.subr.mxu0 %v504
        %1841 = vmatpush1.msra.mxu0 %v503
        %1842 = vmatprep.subr.mxu0 %v510
        %1843 = vmatpush1.msra.mxu0 %v509
        %1844 = vmatprep.subr.mxu0 %v516
        %1845 = vmatpush1.msra.mxu0 %v515
        %1846 = vmatprep.subr.mxu0 %v522
        %1847 = vmatpush1.msra.mxu0 %v521
        %1848 = vmatprep.subr.mxu0 %v528
        %1849 = vmatpush1.msra.mxu0 %v527
        %1850 = vmatprep.subr.mxu0 %v534
        %1851 = vmatpush1.msra.mxu0 %v533
        %1852 = vmatprep.subr.mxu0 %v540
        %1853 = vmatpush1.msra.mxu0 %v539
        %1854 = vmatprep.subr.mxu0 %v546
        %1855 = vmatpush1.msra.mxu0 %v545
        %1856 = vmatprep.subr.mxu0 %v552
        %1857 = vmatpush1.msra.mxu0 %v551
        %1858 = vmatprep.subr.mxu0 %v558
        %1859 = vmatpush1.msra.mxu0 %v557
        %1860 = vmatprep.subr.mxu0 %v564
        %1861 = vmatpush1.msra.mxu0 %v563
        %1862 = vmatprep.subr.mxu0 %v570
        %1863 = vmatpush1.msra.mxu0 %v569
        %1864 = vmatprep.subr.mxu0 %v576
        %1865 = vmatpush1.msra.mxu0 %v575
        %1866 = vmatprep.subr.mxu0 %v582
        %1867 = vmatpush1.msra.mxu0 %v581
        %1868 = vmatprep.subr.mxu0 %v588
        %1869 = vmatpush1.msra.mxu0 %v587
        %1870 = vmatprep.subr.mxu0 %v594
        %1871 = vmatpush1.msra.mxu0 %v593
        %1872 = vmatprep.subr.mxu0 %v600
        %1873 = vmatpush1.msra.mxu0 %v599
        %1874 = vmatprep.subr.mxu0 %v606
        %1875 = vmatpush1.msra.mxu0 %v605
        %1876 = vmatprep.subr.mxu0 %v612
        %1877 = vmatpush1.msra.mxu0 %v611
        %1878 = vmatprep.subr.mxu0 %v618
        %1879 = vmatpush1.msra.mxu0 %v617
        %1880 = vmatprep.subr.mxu0 %v624
        %1881 = vmatpush1.msra.mxu0 %v623
        %1882 = vmatprep.subr.mxu0 %v630
        %1883 = vmatpush1.msra.mxu0 %v629
        %1884 = vmatprep.subr.mxu0 %v636
        %1885 = vmatpush1.msra.mxu0 %v635
        %1886 = vmatprep.mubr.f32.mxu0 %v224
        %1887 = vmatmul.mubr.f32.gmra.mrb[0].mxu0 %v223
        %v1888 = vpop.f32.mrb[0].mxu0
        %v1889 = vadd.f32 %v1800, %v1888
        %v1890 = vpop.f32.mrb[0].mxu0
        %v1891 = vadd.f32 %v1802, %v1890
        %1892 = vmatprep.mubr.f32.mxu0 %v232
        %1893 = vmatmul.mubr.f32.gmra.mrb[0].mxu0 %v231
        %v1894 = vpop.f32.mrb[0].mxu0
        %v1895 = vadd.f32 %v1806, %v1894
        %v1896 = vpop.f32.mrb[0].mxu0
        %v1897 = vadd.f32 %v1808, %v1896
        %1898 = vmatprep.mubr.f32.mxu0 %v240
        %1899 = vmatmul.mubr.f32.gmra.mrb[0].mxu0 %v239
        %v1900 = vpop.f32.mrb[0].mxu0
        %v1901 = vadd.f32 %v1812, %v1900
        %v1902 = vpop.f32.mrb[0].mxu0
        %v1903 = vadd.f32 %v1814, %v1902
        %1904 = vmatprep.mubr.f32.mxu0 %v248
        %1905 = vmatmul.mubr.f32.gmra.mrb[0].mxu0 %v247
        %v1906 = vpop.f32.mrb[0].mxu0
        %v1907 = vadd.f32 %v1818, %v1906
        %v1908 = vpop.f32.mrb[0].mxu0
        %v1909 = vadd.f32 %v1820, %v1908
        %1910 = vdwg.mxu0
        %1911 = vmatprep.subr.mxu0 %v642
        %1912 = vmatpush1.msra.mxu0 %v641
        %1913 = vmatprep.subr.mxu0 %v648
        %1914 = vmatpush1.msra.mxu0 %v647
        %1915 = vmatprep.subr.mxu0 %v654
        %1916 = vmatpush1.msra.mxu0 %v653
        %1917 = vmatprep.subr.mxu0 %v660
        %1918 = vmatpush1.msra.mxu0 %v659
        %1919 = vmatprep.subr.mxu0 %v666
        %1920 = vmatpush1.msra.mxu0 %v665
        %1921 = vmatprep.subr.mxu0 %v672
        %1922 = vmatpush1.msra.mxu0 %v671
        %1923 = vmatprep.subr.mxu0 %v678
        %1924 = vmatpush1.msra.mxu0 %v677
        %1925 = vmatprep.subr.mxu0 %v684
        %1926 = vmatpush1.msra.mxu0 %v683
        %1927 = vmatprep.subr.mxu0 %v690
        %1928 = vmatpush1.msra.mxu0 %v689
        %1929 = vmatprep.subr.mxu0 %v696
        %1930 = vmatpush1.msra.mxu0 %v695
        %1931 = vmatprep.subr.mxu0 %v702
        %1932 = vmatpush1.msra.mxu0 %v701
        %1933 = vmatprep.subr.mxu0 %v708
        %1934 = vmatpush1.msra.mxu0 %v707
        %1935 = vmatprep.subr.mxu0 %v714
        %1936 = vmatpush1.msra.mxu0 %v713
        %1937 = vmatprep.subr.mxu0 %v720
        %1938 = vmatpush1.msra.mxu0 %v719
        %1939 = vmatprep.subr.mxu0 %v726
        %1940 = vmatpush1.msra.mxu0 %v725
        %1941 = vmatprep.subr.mxu0 %v732
        %1942 = vmatpush1.msra.mxu0 %v731
        %1943 = vmatprep.subr.mxu0 %v738
        %1944 = vmatpush1.msra.mxu0 %v737
        %1945 = vmatprep.subr.mxu0 %v744
        %1946 = vmatpush1.msra.mxu0 %v743
        %1947 = vmatprep.subr.mxu0 %v750
        %1948 = vmatpush1.msra.mxu0 %v749
        %1949 = vmatprep.subr.mxu0 %v756
        %1950 = vmatpush1.msra.mxu0 %v755
        %1951 = vmatprep.subr.mxu0 %v762
        %1952 = vmatpush1.msra.mxu0 %v761
        %1953 = vmatprep.subr.mxu0 %v768
        %1954 = vmatpush1.msra.mxu0 %v767
        %1955 = vmatprep.subr.mxu0 %v774
        %1956 = vmatpush1.msra.mxu0 %v773
        %1957 = vmatprep.subr.mxu0 %v780
        %1958 = vmatpush1.msra.mxu0 %v779
        %1959 = vmatprep.subr.mxu0 %v786
        %1960 = vmatpush1.msra.mxu0 %v785
        %1961 = vmatprep.subr.mxu0 %v792
        %1962 = vmatpush1.msra.mxu0 %v791
        %1963 = vmatprep.subr.mxu0 %v798
        %1964 = vmatpush1.msra.mxu0 %v797
        %1965 = vmatprep.subr.mxu0 %v804
        %1966 = vmatpush1.msra.mxu0 %v803
        %1967 = vmatprep.subr.mxu0 %v810
        %1968 = vmatpush1.msra.mxu0 %v809
        %1969 = vmatprep.subr.mxu0 %v816
        %1970 = vmatpush1.msra.mxu0 %v815
        %1971 = vmatprep.subr.mxu0 %v822
        %1972 = vmatpush1.msra.mxu0 %v821
        %1973 = vmatprep.subr.mxu0 %v828
        %1974 = vmatpush1.msra.mxu0 %v827
        %1975 = vmatprep.mubr.f32.mxu0 %v226
        %1976 = vmatmul.mubr.f32.gmra.mrb[0].mxu0 %v225
        %v1977 = vpop.f32.mrb[0].mxu0
        %v1978 = vadd.f32 %v1889, %v1977
        %v1979 = vpop.f32.mrb[0].mxu0
        %v1980 = vadd.f32 %v1891, %v1979
        %1981 = vmatprep.mubr.f32.mxu0 %v234
        %1982 = vmatmul.mubr.f32.gmra.mrb[0].mxu0 %v233
        %v1983 = vpop.f32.mrb[0].mxu0
        %v1984 = vadd.f32 %v1895, %v1983
        %v1985 = vpop.f32.mrb[0].mxu0
        %v1986 = vadd.f32 %v1897, %v1985
        %1987 = vmatprep.mubr.f32.mxu0 %v242
        %1988 = vmatmul.mubr.f32.gmra.mrb[0].mxu0 %v241
        %v1989 = vpop.f32.mrb[0].mxu0
        %v1990 = vadd.f32 %v1901, %v1989
        %v1991 = vpop.f32.mrb[0].mxu0
        %v1992 = vadd.f32 %v1903, %v1991
        %1993 = vmatprep.mubr.f32.mxu0 %v250
        %1994 = vmatmul.mubr.f32.gmra.mrb[0].mxu0 %v249
        %v1995 = vpop.f32.mrb[0].mxu0
        %v1996 = vadd.f32 %v1907, %v1995
        %v1997 = vpop.f32.mrb[0].mxu0
        %v1998 = vadd.f32 %v1909, %v1997
        %1999 = vdwg.mxu0
        %2000 = vmatprep.subr.mxu0 %v834
        %2001 = vmatpush1.msra.mxu0 %v833
        %2002 = vmatprep.subr.mxu0 %v840
        %2003 = vmatpush1.msra.mxu0 %v839
        %2004 = vmatprep.subr.mxu0 %v846
        %2005 = vmatpush1.msra.mxu0 %v845
        %2006 = vmatprep.subr.mxu0 %v852
        %2007 = vmatpush1.msra.mxu0 %v851
        %2008 = vmatprep.subr.mxu0 %v858
        %2009 = vmatpush1.msra.mxu0 %v857
        %2010 = vmatprep.subr.mxu0 %v864
        %2011 = vmatpush1.msra.mxu0 %v863
        %2012 = vmatprep.subr.mxu0 %v870
        %2013 = vmatpush1.msra.mxu0 %v869
        %2014 = vmatprep.subr.mxu0 %v876
        %2015 = vmatpush1.msra.mxu0 %v875
        %2016 = vmatprep.subr.mxu0 %v882
        %2017 = vmatpush1.msra.mxu0 %v881
        %2018 = vmatprep.subr.mxu0 %v888
        %2019 = vmatpush1.msra.mxu0 %v887
        %2020 = vmatprep.subr.mxu0 %v894
        %2021 = vmatpush1.msra.mxu0 %v893
        %2022 = vmatprep.subr.mxu0 %v900
        %2023 = vmatpush1.msra.mxu0 %v899
        %2024 = vmatprep.subr.mxu0 %v906
        %2025 = vmatpush1.msra.mxu0 %v905
        %2026 = vmatprep.subr.mxu0 %v912
        %2027 = vmatpush1.msra.mxu0 %v911
        %2028 = vmatprep.subr.mxu0 %v918
        %2029 = vmatpush1.msra.mxu0 %v917
        %2030 = vmatprep.subr.mxu0 %v924
        %2031 = vmatpush1.msra.mxu0 %v923
        %2032 = vmatprep.subr.mxu0 %v930
        %2033 = vmatpush1.msra.mxu0 %v929
        %2034 = vmatprep.subr.mxu0 %v936
        %2035 = vmatpush1.msra.mxu0 %v935
        %2036 = vmatprep.subr.mxu0 %v942
        %2037 = vmatpush1.msra.mxu0 %v941
        %2038 = vmatprep.subr.mxu0 %v948
        %2039 = vmatpush1.msra.mxu0 %v947
        %2040 = vmatprep.subr.mxu0 %v954
        %2041 = vmatpush1.msra.mxu0 %v953
        %2042 = vmatprep.subr.mxu0 %v960
        %2043 = vmatpush1.msra.mxu0 %v959
        %2044 = vmatprep.subr.mxu0 %v966
        %2045 = vmatpush1.msra.mxu0 %v965
        %2046 = vmatprep.subr.mxu0 %v972
        %2047 = vmatpush1.msra.mxu0 %v971
        %2048 = vmatprep.subr.mxu0 %v978
        %2049 = vmatpush1.msra.mxu0 %v977
        %2050 = vmatprep.subr.mxu0 %v984
        %2051 = vmatpush1.msra.mxu0 %v983
        %2052 = vmatprep.subr.mxu0 %v990
        %2053 = vmatpush1.msra.mxu0 %v989
        %2054 = vmatprep.subr.mxu0 %v996
        %2055 = vmatpush1.msra.mxu0 %v995
        %2056 = vmatprep.subr.mxu0 %v1002
        %2057 = vmatpush1.msra.mxu0 %v1001
        %2058 = vmatprep.subr.mxu0 %v1008
        %2059 = vmatpush1.msra.mxu0 %v1007
        %2060 = vmatprep.subr.mxu0 %v1014
        %2061 = vmatpush1.msra.mxu0 %v1013
        %2062 = vmatprep.subr.mxu0 %v1020
        %2063 = vmatpush1.msra.mxu0 %v1019
        %2064 = vmatprep.mubr.f32.mxu0 %v228
        %2065 = vmatmul.mubr.f32.gmra.mrb[0].mxu0 %v227
        %v2066 = vpop.f32.mrb[0].mxu0
        %v2067 = vadd.f32 %v1978, %v2066
        %v2068 = vpop.f32.mrb[0].mxu0
        %v2069 = vadd.f32 %v1980, %v2068
        %2070 = vmatprep.mubr.f32.mxu0 %v236
        %2071 = vmatmul.mubr.f32.gmra.mrb[0].mxu0 %v235
        %v2072 = vpop.f32.mrb[0].mxu0
        %v2073 = vadd.f32 %v1984, %v2072
        %v2074 = vpop.f32.mrb[0].mxu0
        %v2075 = vadd.f32 %v1986, %v2074
        %2076 = vmatprep.mubr.f32.mxu0 %v244
        %2077 = vmatmul.mubr.f32.gmra.mrb[0].mxu0 %v243
        %v2078 = vpop.f32.mrb[0].mxu0
        %v2079 = vadd.f32 %v1990, %v2078
        %v2080 = vpop.f32.mrb[0].mxu0
        %v2081 = vadd.f32 %v1992, %v2080
        %2082 = vmatprep.mubr.f32.mxu0 %v252
        %2083 = vmatmul.mubr.f32.gmra.mrb[0].mxu0 %v251
        %v2084 = vpop.f32.mrb[0].mxu0
        %v2085 = vadd.f32 %v1996, %v2084
        %v2086 = vpop.f32.mrb[0].mxu0
        %v2087 = vadd.f32 %v1998, %v2086
        %2088 = vdwg.mxu0
        %v2089 = vmul.f32 %v1355, %v1355
        %v2090 = vmul.f32 %v1357, %v1357
        %v2091 = vmul.f32 %v1711, %v1711
        %v2092 = vmul.f32 %v1361, %v1361
        %v2093 = vmul.f32 %v1363, %v1363
        %v2094 = vmul.f32 %v1717, %v1717
        %v2095 = vmul.f32 %v1367, %v1367
        %v2096 = vmul.f32 %v1369, %v1369
        %v2097 = vmul.f32 %v1723, %v1723
        %v2098 = vmul.f32 %v1373, %v1373
        %v2099 = vmul.f32 %v1375, %v1375
        %v2100 = vmul.f32 %v1729, %v1729
        %v2101 = vmul.f32 %v1713, %v1713
        %v2102 = vmul.f32 %v2067, %v2067
        %v2103 = vmul.f32 %v2069, %v2069
        %v2104 = vmul.f32 %v1719, %v1719
        %v2105 = vmul.f32 %v2073, %v2073
        %v2106 = vmul.f32 %v2075, %v2075
        %v2107 = vmul.f32 %v1725, %v1725
        %v2108 = vmul.f32 %v2079, %v2079
        %v2109 = vmul.f32 %v2081, %v2081
        %v2110 = vmul.f32 %v1731, %v1731
        %v2111 = vmul.f32 %v2085, %v2085
        %v2112 = vmul.f32 %v2087, %v2087
        %v2113 = vadd.f32 %v2089, %v2101
        %v2114 = vadd.f32 %v2090, %v2102
        %v2115 = vadd.f32 %v2091, %v2103
        %v2116 = vadd.f32 %v2092, %v2104
        %v2117 = vadd.f32 %v2093, %v2105
        %v2118 = vadd.f32 %v2094, %v2106
        %v2119 = vadd.f32 %v2095, %v2107
        %v2120 = vadd.f32 %v2096, %v2108
        %v2121 = vadd.f32 %v2097, %v2109
        %v2122 = vadd.f32 %v2098, %v2110
        %v2123 = vadd.f32 %v2099, %v2111
        %v2124 = vadd.f32 %v2100, %v2112
        %v2125 = vmax.f32 %v2113, 1e-10
        %v2126 = vmax.f32 %v2114, 1e-10
        %v2127 = vmax.f32 %v2115, 1e-10
        %v2128 = vmax.f32 %v2116, 1e-10
        %v2129 = vmax.f32 %v2117, 1e-10
        %v2130 = vmax.f32 %v2118, 1e-10
        %v2131 = vmax.f32 %v2119, 1e-10
        %v2132 = vmax.f32 %v2120, 1e-10
        %v2133 = vmax.f32 %v2121, 1e-10
        %v2134 = vmax.f32 %v2122, 1e-10
        %v2135 = vmax.f32 %v2123, 1e-10
        %v2136 = vmax.f32 %v2124, 1e-10
        %v2137 = vrsqrt.pop %v2125
        %v2138 = vmul.f32 %v2125, %v2137
        %vm2139 = vcmp.eq.f32.partialorder %v2125, inf
        %v2140 = vsel %vm2139, %v2125, %v2138
        %vm2141 = vcmp.eq.f32.partialorder %v2125, 0.0
        %v2142 = vand.u32 %v2125, 2147483648
        %v2143 = vsel %vm2141, %v2142, %v2140
        %v2144 = vrsqrt.pop %v2126
        %v2145 = vmul.f32 %v2126, %v2144
        %vm2146 = vcmp.eq.f32.partialorder %v2126, inf
        %v2147 = vsel %vm2146, %v2126, %v2145
        %vm2148 = vcmp.eq.f32.partialorder %v2126, 0.0
        %v2149 = vand.u32 %v2126, 2147483648
        %v2150 = vsel %vm2148, %v2149, %v2147
        %v2151 = vrsqrt.pop %v2127
        %v2152 = vmul.f32 %v2127, %v2151
        %vm2153 = vcmp.eq.f32.partialorder %v2127, inf
        %v2154 = vsel %vm2153, %v2127, %v2152
        %vm2155 = vcmp.eq.f32.partialorder %v2127, 0.0
        %v2156 = vand.u32 %v2127, 2147483648
        %v2157 = vsel %vm2155, %v2156, %v2154
        %v2158 = vrsqrt.pop %v2128
        %v2159 = vmul.f32 %v2128, %v2158
        %vm2160 = vcmp.eq.f32.partialorder %v2128, inf
        %v2161 = vsel %vm2160, %v2128, %v2159
        %vm2162 = vcmp.eq.f32.partialorder %v2128, 0.0
        %v2163 = vand.u32 %v2128, 2147483648
        %v2164 = vsel %vm2162, %v2163, %v2161
        %v2165 = vrsqrt.pop %v2129
        %v2166 = vmul.f32 %v2129, %v2165
        %vm2167 = vcmp.eq.f32.partialorder %v2129, inf
        %v2168 = vsel %vm2167, %v2129, %v2166
        %vm2169 = vcmp.eq.f32.partialorder %v2129, 0.0
        %v2170 = vand.u32 %v2129, 2147483648
        %v2171 = vsel %vm2169, %v2170, %v2168
        %v2172 = vrsqrt.pop %v2130
        %v2173 = vmul.f32 %v2130, %v2172
        %vm2174 = vcmp.eq.f32.partialorder %v2130, inf
        %v2175 = vsel %vm2174, %v2130, %v2173
        %vm2176 = vcmp.eq.f32.partialorder %v2130, 0.0
        %v2177 = vand.u32 %v2130, 2147483648
        %v2178 = vsel %vm2176, %v2177, %v2175
        %v2179 = vrsqrt.pop %v2131
        %v2180 = vmul.f32 %v2131, %v2179
        %vm2181 = vcmp.eq.f32.partialorder %v2131, inf
        %v2182 = vsel %vm2181, %v2131, %v2180
        %vm2183 = vcmp.eq.f32.partialorder %v2131, 0.0
        %v2184 = vand.u32 %v2131, 2147483648
        %v2185 = vsel %vm2183, %v2184, %v2182
        %v2186 = vrsqrt.pop %v2132
        %v2187 = vmul.f32 %v2132, %v2186
        %vm2188 = vcmp.eq.f32.partialorder %v2132, inf
        %v2189 = vsel %vm2188, %v2132, %v2187
        %vm2190 = vcmp.eq.f32.partialorder %v2132, 0.0
        %v2191 = vand.u32 %v2132, 2147483648
        %v2192 = vsel %vm2190, %v2191, %v2189
        %v2193 = vrsqrt.pop %v2133
        %v2194 = vmul.f32 %v2133, %v2193
        %vm2195 = vcmp.eq.f32.partialorder %v2133, inf
        %v2196 = vsel %vm2195, %v2133, %v2194
        %vm2197 = vcmp.eq.f32.partialorder %v2133, 0.0
        %v2198 = vand.u32 %v2133, 2147483648
        %v2199 = vsel %vm2197, %v2198, %v2196
        %v2200 = vrsqrt.pop %v2134
        %v2201 = vmul.f32 %v2134, %v2200
        %vm2202 = vcmp.eq.f32.partialorder %v2134, inf
        %v2203 = vsel %vm2202, %v2134, %v2201
        %vm2204 = vcmp.eq.f32.partialorder %v2134, 0.0
        %v2205 = vand.u32 %v2134, 2147483648
        %v2206 = vsel %vm2204, %v2205, %v2203
        %v2207 = vrsqrt.pop %v2135
        %v2208 = vmul.f32 %v2135, %v2207
        %vm2209 = vcmp.eq.f32.partialorder %v2135, inf
        %v2210 = vsel %vm2209, %v2135, %v2208
        %vm2211 = vcmp.eq.f32.partialorder %v2135, 0.0
        %v2212 = vand.u32 %v2135, 2147483648
        %v2213 = vsel %vm2211, %v2212, %v2210
        %v2214 = vrsqrt.pop %v2136
        %v2215 = vmul.f32 %v2136, %v2214
        %vm2216 = vcmp.eq.f32.partialorder %v2136, inf
        %v2217 = vsel %vm2216, %v2136, %v2215
        %vm2218 = vcmp.eq.f32.partialorder %v2136, 0.0
        %v2219 = vand.u32 %v2136, 2147483648
        %v2220 = vsel %vm2218, %v2219, %v2217
        %v2221 = vld [vmem:[#allocation7] sm:$0xff]
        %v2222 = vld [vmem:[#allocation7 + $0x8] sm:$0xff]
        %v2223 = vld [vmem:[#allocation7 + $0x10] sm:$0xff]
        %v2224 = vld [vmem:[#allocation7 + $0x18] sm:$0xff]
        %v2225 = vld [vmem:[#allocation7 + $0x20] sm:$0xff]
        %v2226 = vld [vmem:[#allocation7 + $0x28] sm:$0xff]
        %v2227 = vld [vmem:[#allocation7 + $0x30] sm:$0xff]
        %v2228 = vld [vmem:[#allocation7 + $0x38] sm:$0xff]
        %v2229 = vld [vmem:[#allocation7 + $0x40] sm:$0xff]
        %v2230 = vld [vmem:[#allocation7 + $0x48] sm:$0xff]
        %v2231 = vld [vmem:[#allocation7 + $0x50] sm:$0xff]
        %v2232 = vld [vmem:[#allocation7 + $0x58] sm:$0xff]
        %v2233 = vld [vmem:[#allocation7 + $0x60] sm:$0xff]
        %v2234 = vld [vmem:[#allocation7 + $0x68] sm:$0xff]
        %v2235 = vld [vmem:[#allocation7 + $0x70] sm:$0xff]
        %v2236 = vld [vmem:[#allocation7 + $0x78] sm:$0xff]
        %v2237 = vld [vmem:[#allocation7 + $0x80] sm:$0xff]
        %v2238 = vld [vmem:[#allocation7 + $0x88] sm:$0xff]
        %v2239 = vld [vmem:[#allocation7 + $0x90] sm:$0xff]
        %v2240 = vld [vmem:[#allocation7 + $0x98] sm:$0xff]
        %v2241 = vld [vmem:[#allocation7 + $0xa0] sm:$0xff]
        %v2242 = vld [vmem:[#allocation7 + $0xa8] sm:$0xff]
        %v2243 = vld [vmem:[#allocation7 + $0xb0] sm:$0xff]
        %v2244 = vld [vmem:[#allocation7 + $0xb8] sm:$0xff]
        %v2245 = vld [vmem:[#allocation7 + $0xc0] sm:$0xff]
        %v2246 = vld [vmem:[#allocation7 + $0xc8] sm:$0xff]
        %v2247 = vld [vmem:[#allocation7 + $0xd0] sm:$0xff]
        %v2248 = vld [vmem:[#allocation7 + $0xd8] sm:$0xff]
        %v2249 = vld [vmem:[#allocation7 + $0xe0] sm:$0xff]
        %v2250 = vld [vmem:[#allocation7 + $0xe8] sm:$0xff]
        %v2251 = vld [vmem:[#allocation7 + $0xf0] sm:$0xff]
        %v2252 = vld [vmem:[#allocation7 + $0xf8] sm:$0xff]
        %v2253 = vld [vmem:[#allocation7 + $0x100] sm:$0xff]
        %v2254 = vld [vmem:[#allocation7 + $0x108] sm:$0xff]
        %v2255 = vld [vmem:[#allocation7 + $0x110] sm:$0xff]
        %v2256 = vld [vmem:[#allocation7 + $0x118] sm:$0xff]
        %v2257 = vld [vmem:[#allocation7 + $0x120] sm:$0xff]
        %v2258 = vld [vmem:[#allocation7 + $0x128] sm:$0xff]
        %v2259 = vld [vmem:[#allocation7 + $0x130] sm:$0xff]
        %v2260 = vld [vmem:[#allocation7 + $0x138] sm:$0xff]
        %v2261 = vld [vmem:[#allocation7 + $0x140] sm:$0xff]
        %v2262 = vld [vmem:[#allocation7 + $0x148] sm:$0xff]
        %v2263 = vld [vmem:[#allocation7 + $0x150] sm:$0xff]
        %v2264 = vld [vmem:[#allocation7 + $0x158] sm:$0xff]
        %v2265 = vld [vmem:[#allocation7 + $0x160] sm:$0xff]
        %v2266 = vld [vmem:[#allocation7 + $0x168] sm:$0xff]
        %v2267 = vld [vmem:[#allocation7 + $0x170] sm:$0xff]
        %v2268 = vld [vmem:[#allocation7 + $0x178] sm:$0xff]
        %2269 = vmatprep.subr.mxu0 0.0
        %2270 = vmatpush1.msra.mxu0 %v2221
        %2271 = vmatprep.subr.mxu0 0.0
        %2272 = vmatpush1.msra.mxu0 %v2222
        %2273 = vmatprep.subr.mxu0 0.0
        %2274 = vmatpush1.msra.mxu0 %v2223
        %2275 = vmatprep.subr.mxu0 0.0
        %2276 = vmatpush1.msra.mxu0 %v2224
        %2277 = vmatprep.subr.mxu0 0.0
        %2278 = vmatpush1.msra.mxu0 %v2225
        %2279 = vmatprep.subr.mxu0 0.0
        %2280 = vmatpush1.msra.mxu0 %v2226
        %2281 = vmatprep.subr.mxu0 0.0
        %2282 = vmatpush1.msra.mxu0 %v2227
        %2283 = vmatprep.subr.mxu0 0.0
        %2284 = vmatpush1.msra.mxu0 %v2228
        %2285 = vmatprep.subr.mxu0 0.0
        %2286 = vmatpush1.msra.mxu0 %v2229
        %2287 = vmatprep.subr.mxu0 0.0
        %2288 = vmatpush1.msra.mxu0 %v2230
        %2289 = vmatprep.subr.mxu0 0.0
        %2290 = vmatpush1.msra.mxu0 %v2231
        %2291 = vmatprep.subr.mxu0 0.0
        %2292 = vmatpush1.msra.mxu0 %v2232
        %2293 = vmatprep.subr.mxu0 0.0
        %2294 = vmatpush1.msra.mxu0 %v2233
        %2295 = vmatprep.subr.mxu0 0.0
        %2296 = vmatpush1.msra.mxu0 %v2234
        %2297 = vmatprep.subr.mxu0 0.0
        %2298 = vmatpush1.msra.mxu0 %v2235
        %2299 = vmatprep.subr.mxu0 0.0
        %2300 = vmatpush1.msra.mxu0 %v2236
        %2301 = vmatprep.subr.mxu0 0.0
        %2302 = vmatpush1.msra.mxu0 %v2237
        %2303 = vmatprep.subr.mxu0 0.0
        %2304 = vmatpush1.msra.mxu0 %v2238
        %2305 = vmatprep.subr.mxu0 0.0
        %2306 = vmatpush1.msra.mxu0 %v2239
        %2307 = vmatprep.subr.mxu0 0.0
        %2308 = vmatpush1.msra.mxu0 %v2240
        %2309 = vmatprep.subr.mxu0 0.0
        %2310 = vmatpush1.msra.mxu0 %v2241
        %2311 = vmatprep.subr.mxu0 0.0
        %2312 = vmatpush1.msra.mxu0 %v2242
        %2313 = vmatprep.subr.mxu0 0.0
        %2314 = vmatpush1.msra.mxu0 %v2243
        %2315 = vmatprep.subr.mxu0 0.0
        %2316 = vmatpush1.msra.mxu0 %v2244
        %2317 = vmatprep.subr.mxu0 0.0
        %2318 = vmatpush1.msra.mxu0 %v2245
        %2319 = vmatprep.subr.mxu0 0.0
        %2320 = vmatpush1.msra.mxu0 %v2246
        %2321 = vmatprep.subr.mxu0 0.0
        %2322 = vmatpush1.msra.mxu0 %v2247
        %2323 = vmatprep.subr.mxu0 0.0
        %2324 = vmatpush1.msra.mxu0 %v2248
        %2325 = vmatprep.subr.mxu0 0.0
        %2326 = vmatpush1.msra.mxu0 %v2249
        %2327 = vmatprep.subr.mxu0 0.0
        %2328 = vmatpush1.msra.mxu0 %v2250
        %2329 = vmatprep.subr.mxu0 0.0
        %2330 = vmatpush1.msra.mxu0 %v2251
        %2331 = vmatprep.subr.mxu0 0.0
        %2332 = vmatpush1.msra.mxu0 %v2252
        %2333 = vmatprep.mubr.f32.mxu0 %v2150
        %2334 = vmatmul.mubr.f32.gmra.mrb[0].mxu0 %v2143
        %v2335 = vpop.f32.mrb[0].mxu0
        %v2336 = vadd.f32 0.0, %v2335
        %v2337 = vpop.f32.mrb[0].mxu0
        %2338 = vmatprep.mubr.f32.mxu0 %v2171
        %2339 = vmatmul.mubr.f32.gmra.mrb[0].mxu0 %v2164
        %v2340 = vpop.f32.mrb[0].mxu0
        %v2341 = vadd.f32 0.0, %v2340
        %v2342 = vpop.f32.mrb[0].mxu0
        %2343 = vmatprep.mubr.f32.mxu0 %v2192
        %2344 = vmatmul.mubr.f32.gmra.mrb[0].mxu0 %v2185
        %v2345 = vpop.f32.mrb[0].mxu0
        %v2346 = vadd.f32 0.0, %v2345
        %v2347 = vpop.f32.mrb[0].mxu0
        %2348 = vmatprep.mubr.f32.mxu0 %v2213
        %2349 = vmatmul.mubr.f32.gmra.mrb[0].mxu0 %v2206
        %v2350 = vpop.f32.mrb[0].mxu0
        %v2351 = vadd.f32 0.0, %v2350
        %v2352 = vpop.f32.mrb[0].mxu0
        %2353 = vdwg.mxu0
        %2354 = vmatprep.subr.mxu0 0.0
        %2355 = vmatpush1.msra.mxu0 %v2253
        %2356 = vmatprep.subr.mxu0 0.0
        %2357 = vmatpush1.msra.mxu0 %v2254
        %2358 = vmatprep.subr.mxu0 0.0
        %2359 = vmatpush1.msra.mxu0 %v2255
        %2360 = vmatprep.subr.mxu0 0.0
        %2361 = vmatpush1.msra.mxu0 %v2256
        %2362 = vmatprep.subr.mxu0 0.0
        %2363 = vmatpush1.msra.mxu0 %v2257
        %2364 = vmatprep.subr.mxu0 0.0
        %2365 = vmatpush1.msra.mxu0 %v2258
        %2366 = vmatprep.subr.mxu0 0.0
        %2367 = vmatpush1.msra.mxu0 %v2259
        %2368 = vmatprep.subr.mxu0 0.0
        %2369 = vmatpush1.msra.mxu0 %v2260
        %2370 = vmatprep.subr.mxu0 0.0
        %2371 = vmatpush1.msra.mxu0 %v2261
        %2372 = vmatprep.subr.mxu0 0.0
        %2373 = vmatpush1.msra.mxu0 %v2262
        %2374 = vmatprep.subr.mxu0 0.0
        %2375 = vmatpush1.msra.mxu0 %v2263
        %2376 = vmatprep.subr.mxu0 0.0
        %2377 = vmatpush1.msra.mxu0 %v2264
        %2378 = vmatprep.subr.mxu0 0.0
        %2379 = vmatpush1.msra.mxu0 %v2265
        %2380 = vmatprep.subr.mxu0 0.0
        %2381 = vmatpush1.msra.mxu0 %v2266
        %2382 = vmatprep.subr.mxu0 0.0
        %2383 = vmatpush1.msra.mxu0 %v2267
        %2384 = vmatprep.subr.mxu0 0.0
        %2385 = vmatpush1.msra.mxu0 %v2268
        %2386 = vmatprep.subr.mxu0 0.0
        %2387 = vmatpush1.msra.mxu0 0.0
        %2388 = vmatprep.subr.mxu0 0.0
        %2389 = vmatpush1.msra.mxu0 0.0
        %2390 = vmatprep.subr.mxu0 0.0
        %2391 = vmatpush1.msra.mxu0 0.0
        %2392 = vmatprep.subr.mxu0 0.0
        %2393 = vmatpush1.msra.mxu0 0.0
        %2394 = vmatprep.subr.mxu0 0.0
        %2395 = vmatpush1.msra.mxu0 0.0
        %2396 = vmatprep.subr.mxu0 0.0
        %2397 = vmatpush1.msra.mxu0 0.0
        %2398 = vmatprep.subr.mxu0 0.0
        %2399 = vmatpush1.msra.mxu0 0.0
        %2400 = vmatprep.subr.mxu0 0.0
        %2401 = vmatpush1.msra.mxu0 0.0
        %2402 = vmatprep.subr.mxu0 0.0
        %2403 = vmatpush1.msra.mxu0 0.0
        %2404 = vmatprep.subr.mxu0 0.0
        %2405 = vmatpush1.msra.mxu0 0.0
        %2406 = vmatprep.subr.mxu0 0.0
        %2407 = vmatpush1.msra.mxu0 0.0
        %2408 = vmatprep.subr.mxu0 0.0
        %2409 = vmatpush1.msra.mxu0 0.0
        %2410 = vmatprep.subr.mxu0 0.0
        %2411 = vmatpush1.msra.mxu0 0.0
        %2412 = vmatprep.subr.mxu0 0.0
        %2413 = vmatpush1.msra.mxu0 0.0
        %2414 = vmatprep.subr.mxu0 0.0
        %2415 = vmatpush1.msra.mxu0 0.0
        %2416 = vmatprep.subr.mxu0 0.0
        %2417 = vmatpush1.msra.mxu0 0.0
        %2418 = vmatprep.mubr.f32.mxu0 0.0
        %2419 = vmatmul.mubr.f32.gmra.mrb[0].mxu0 %v2157
        %v2420 = vpop.f32.mrb[0].mxu0
        %v2421 = vadd.f32 %v2336, %v2420
        %v2422 = vpop.f32.mrb[0].mxu0
        %2423 = vmatprep.mubr.f32.mxu0 0.0
        %2424 = vmatmul.mubr.f32.gmra.mrb[0].mxu0 %v2178
        %v2425 = vpop.f32.mrb[0].mxu0
        %v2426 = vadd.f32 %v2341, %v2425
        %v2427 = vpop.f32.mrb[0].mxu0
        %2428 = vmatprep.mubr.f32.mxu0 0.0
        %2429 = vmatmul.mubr.f32.gmra.mrb[0].mxu0 %v2199
        %v2430 = vpop.f32.mrb[0].mxu0
        %v2431 = vadd.f32 %v2346, %v2430
        %v2432 = vpop.f32.mrb[0].mxu0
        %2433 = vmatprep.mubr.f32.mxu0 0.0
        %2434 = vmatmul.mubr.f32.gmra.mrb[0].mxu0 %v2220
        %v2435 = vpop.f32.mrb[0].mxu0
        %v2436 = vadd.f32 %v2351, %v2435
        %v2437 = vpop.f32.mrb[0].mxu0
        %2438 = vdwg.mxu0
        %v2439 = vmax.f32 %v2421, 1e-10
        %v2440 = vmax.f32 %v2426, 1e-10
        %v2441 = vmax.f32 %v2431, 1e-10
        %v2442 = vmax.f32 %v2436, 1e-10
        %v2443 = vlog2.pop %v2439
        %v2444 = vmul.f32 %v2443, 0.6931472
        %v2445 = vlog2.pop %v2440
        %v2446 = vmul.f32 %v2445, 0.6931472
        %v2447 = vlog2.pop %v2441
        %v2448 = vmul.f32 %v2447, 0.6931472
        %v2449 = vlog2.pop %v2442
        %v2450 = vmul.f32 %v2449, 0.6931472
        %v2451 = vmul.f32 %v2444, 0.4342945
        %v2452 = vmul.f32 %v2446, 0.4342945
        %v2453 = vmul.f32 %v2448, 0.4342945
        %v2454 = vmul.f32 %v2450, 0.4342945
        %2455 = vst [vmem:[%s218] sm:$0xff] %v2451
        %2456 = vst [vmem:[%s218 + $0x8] sm:$0xff] %v2452
        %2457 = vst [vmem:[%s218 + $0x10] sm:$0xff] %v2453
        %2458 = vst [vmem:[%s218 + $0x18] sm:$0xff] %v2454
        %s2459 = sand.u32 %s97, 1
        %s2460 = scalar_lea.sflag [#allocation4], %s2459
        %s2461 = sand.u32 %s97, 1
        %s2462 = smul.addr %s2461, 32
        %s2463 = scalar_lea.vmem [#allocation8], %s2462
        // Predicated region
        $region45: #{tpu_custom_call.1} parent=31 // pred_check
          %p2464 = pneg %p107
        $region46: #{tpu_custom_call.1} parent=31 // pred_check_branch
          %2466 = sbr.rel (%p2464) target = $region48
        $region47: #{tpu_custom_call.1} parent=31 // pred_region
          %s2467 = smul.u32 4, %s21
          %s2469 = ssub.s32 512, 512
          %2470 = vsyncadd %s2460, %s2469
          %s2471 = smul.addr %s2467, 128
          %s2472 = scalar_lea.hbm %s3, %s2471
          %s2473 = sshll.u32 %s2463, 4
          %s2474 = int_to_ptr.vmem [resolvable:$true] %s2473
          %2479 = dma.vmem_to_hbm [thread:$0]  %s2474, 512, %s2472, %s2460, 128, 128, 8
        $region48: #{tpu_custom_call.1} parent=31 // pred_fallthru
          _
      $region32: #{tpu_custom_call.1} parent=5 // pred_fallthru
        _
      %p2480 = scmp.le.s32.totalorder 2, %s16
      // Predicated region
      $region49: #{tpu_custom_call.1} parent=5 // pred_check
        %p2481 = pneg %p2480
      $region50: #{tpu_custom_call.1} parent=5 // pred_check_branch
        %2483 = sbr.rel (%p2481) target = $region52
      $region51: #{tpu_custom_call.1} parent=5 // pred_region
        %s2484 = ssub.s32 %s16, 2
        // Predicated region
        $region53: #{tpu_custom_call.1} parent=51 // pred_check
          %p2485 = pneg %p113
        $region54: #{tpu_custom_call.1} parent=51 // pred_check_branch
          %2487 = sbr.rel (%p2485) target = $region56
        $region55: #{tpu_custom_call.1} parent=51 // pred_region
          %s2488 = sand.u32 %s98, 1
          %s2489 = scalar_lea.sflag [#allocation4], %s2488
          %s2490 = sand.u32 %s98, 1
          %s2491 = smul.addr %s2490, 32
          %s2492 = scalar_lea.vmem [#allocation8], %s2491
          %2493 = dma.done %s2489, 512
        $region56: #{tpu_custom_call.1} parent=51 // pred_fallthru
          _
      $region52: #{tpu_custom_call.1} parent=5 // pred_fallthru
        _
    $region6: #{tpu_custom_call.1} parent=1 // loop_footer
      %s20 = sadd.s32 1, %s16
    $region7: #{tpu_custom_call.1} parent=1 // loop_footer_branch
      %15 = sbr.rel target = $region3
    $region8: #{tpu_custom_call.1} parent=1 // loop_exit
      _
    %2494 = vsyncpa [#allocation3], 1
    %s2495 = scalar_lea.sflag [#allocation3], 1
    %2496 = vsyncpa %s2495, 1
    %2497 = vsyncpa [#allocation6], 1
    %2498 = vsyncpa [#allocation4], 1
    %s2499 = scalar_lea.sflag [#allocation4], 1
    %2500 = vsyncpa %s2499, 1

</llo_original>
